<compile_context>
chip_gen: v7x
topology: tpu7x:2x2x1
jax: 0.10.0
libtpu: 0.0.40
codegen_flags: <defaults>
</compile_context>

<pallas_src>
import jax
import jax.numpy as jnp
from jax import lax
from jax.experimental import pallas as pl
from jax.experimental.pallas import tpu as pltpu

C_IN = 4       # channels of tenInput / tenRef
C_CAT = 2 * C_IN
C_HID = 16
C_OUT = C_IN
K = 3          # 3x3 convs, padding=1

CK1 = K * K * C_CAT                  # 72  stacked taps for conv1
CK2 = K * K * C_HID                  # 144 stacked taps for conv2
CK1P = ((CK1 + 1 + 7) // 8) * 8      # 80  (+bias row, padded to sublane mult.)
CK2P = ((CK2 + 1 + 7) // 8) * 8      # 152


def _make_kernel(H, W, NB):
    HW = H * W
    L = NB * HW   # lanes per block (NB whole images folded into lanes)

    def kernel(x_ref, r_ref, w1_ref, w2_ref, out_ref, taps1_ref, taps2_ref):
        # x_ref / r_ref : (C_IN, L)      channels on sublanes, batch*HW on lanes
        # w1_ref        : (C_HID, CK1P)  stacked conv1 weights (+bias col, 0-pad)
        # w2_ref        : (C_OUT, CK2P)  stacked conv2 weights (+bias col, 0-pad)
        # out_ref       : (C_OUT, L)
        # taps1_ref     : (CK1P, L) VMEM scratch — stacked conv1 taps
        # taps2_ref     : (CK2P, L) VMEM scratch — stacked conv2 taps
        x = x_ref[...]                                    # (C_IN, L), residual
        xr = jnp.concatenate([x, r_ref[...]], axis=0)     # (C_CAT, L)

        # Per-image boundary masks, hoisted once.  Batch is folded into lanes,
        # so positions are taken modulo HW to stay per-image; the roll wraps
        # across image boundaries only at masked-out positions.
        pos = lax.broadcasted_iota(jnp.int32, (1, L), 1)
        p = pos % HW
        col = pos % W
        not_top = p >= W
        not_bot = p < (H - 1) * W
        not_lft = col != 0
        not_rgt = col != (W - 1)

        def tap_mask(dy, dx):
            m = None
            if dy == 0:
                m = not_top
            elif dy == 2:
                m = not_bot
            if dx == 0:
                m = not_lft if m is None else jnp.logical_and(m, not_lft)
            elif dx == 2:
                m = not_rgt if m is None else jnp.logical_and(m, not_rgt)
            return m

        def stack_taps(src, c, taps_ref):
            """Write the 9 shifted/masked taps of `src` (c, L) into taps_ref
            stacked along the contraction axis, then fill the remaining rows
            with ones (bias row; the extra padded rows have zero weights)."""
            for dy in range(K):
                for dx in range(K):
                    t = dy * K + dx
                    off = (dy - 1) * W + (dx - 1)
                    s = src if off == 0 else pltpu.roll(
                        src, shift=(-off) % L, axis=1)
                    m = tap_mask(dy, dx)
                    if m is not None:
                        s = jnp.where(m, s, 0.0)
                    taps_ref[t * c:(t + 1) * c, :] = s.astype(taps_ref.dtype)
            pad_rows = taps_ref.shape[0] - K * K * c
            taps_ref[K * K * c:, :] = jnp.ones((pad_rows, L), taps_ref.dtype)

        # conv1: 3x3 over concat(x, r) -> C_HID, bias folded in, ReLU.
        stack_taps(xr, C_CAT, taps1_ref)
        hid = jnp.maximum(
            jnp.dot(w1_ref[...], taps1_ref[...],
                    preferred_element_type=jnp.float32), 0.0)

        # conv2: 3x3 over hidden -> C_OUT, bias folded in, + residual.
        stack_taps(hid, C_HID, taps2_ref)
        y = jnp.dot(w2_ref[...], taps2_ref[...],
                    preferred_element_type=jnp.float32) + x
        out_ref[...] = y.astype(out_ref.dtype)

    return kernel


def model_forward(ten_input_nchw, ten_ref_nchw, params, *,
                  batch_tile=None, use_bf16_mxu=False):
    """Mirrors Model.forward(tenInput, tenRef). Inputs are NCHW float32."""
    w1, b1, w2, b2 = params
    N, C, H, W = ten_input_nchw.shape
    assert C == C_IN and ten_ref_nchw.shape == ten_input_nchw.shape
    HW = H * W

    # Whole images per block (batch folded into lanes).  For large N choose a
    # batch_tile giving >=2 parallel grid steps (v7x megacore) while keeping
    # the block working set comfortably inside VMEM.
    NB = N if batch_tile is None else batch_tile
    assert N % NB == 0
    L = NB * HW

    # Channels-major layout with the batch folded into the lane axis.
    x = ten_input_nchw.astype(jnp.float32).transpose(1, 0, 2, 3).reshape(
        C_IN, N * HW)
    r = ten_ref_nchw.astype(jnp.float32).transpose(1, 0, 2, 3).reshape(
        C_IN, N * HW)

    # Stacked per-tap weights (C_out, tap*C_in) with the bias folded in as an
    # extra column (matching the constant-ones rows of the tap scratch) and
    # zero columns padding the contraction to a sublane multiple.
    mxu_dtype = jnp.bfloat16 if use_bf16_mxu else jnp.float32
    w1s = jnp.transpose(w1, (3, 0, 1, 2)).reshape(C_HID, CK1)
    w1s = jnp.concatenate(
        [w1s, b1.reshape(C_HID, 1),
         jnp.zeros((C_HID, CK1P - CK1 - 1), jnp.float32)], axis=1)
    w2s = jnp.transpose(w2, (3, 0, 1, 2)).reshape(C_OUT, CK2)
    w2s = jnp.concatenate(
        [w2s, b2.reshape(C_OUT, 1),
         jnp.zeros((C_OUT, CK2P - CK2 - 1), jnp.float32)], axis=1)
    w1s = w1s.astype(mxu_dtype)
    w2s = w2s.astype(mxu_dtype)

    # TODO(synk): for real frame sizes add a row-tile grid axis with a 1-row
    # halo and an explicit vmem_limit_bytes so blocks stay under v7x's 64 MiB
    # VMEM; full-image blocks are ample at these test shapes.
    out_flat = pl.pallas_call(
        _make_kernel(H, W, NB),
        out_shape=jax.ShapeDtypeStruct((C_OUT, N * HW), jnp.float32),
        grid_spec=pltpu.PrefetchScalarGridSpec(
            num_scalar_prefetch=0,
            grid=(N // NB,),
            in_specs=[
                pl.BlockSpec((C_IN, L), lambda b: (0, b)),
                pl.BlockSpec((C_IN, L), lambda b: (0, b)),
                pl.BlockSpec((C_HID, CK1P), lambda b: (0, 0)),
                pl.BlockSpec((C_OUT, CK2P), lambda b: (0, 0)),
            ],
            out_specs=pl.BlockSpec((C_OUT, L), lambda b: (0, b)),
            scratch_shapes=[
                pltpu.VMEM((CK1P, L), mxu_dtype),
                pltpu.VMEM((CK2P, L), mxu_dtype),
            ],
        ),
        compiler_params=pltpu.CompilerParams(
            dimension_semantics=("parallel",)),
    )(x, r, w1s, w2s)

    # (C, N*HW) -> (N, C, H, W)
    return out_flat.reshape(C_OUT, N, H, W).transpose(1, 0, 2, 3)


def _reference_forward(ten_input_nchw, ten_ref_nchw, params):
    """Pure-JAX reference (lax conv) for correctness checking."""
    w1, b1, w2, b2 = params
    xcat = jnp.concatenate([ten_input_nchw, ten_ref_nchw], axis=1)     # NCHW
    h = lax.conv_general_dilated(xcat, w1, (1, 1), [(1, 1), (1, 1)],
                                 dimension_numbers=("NCHW", "HWIO", "NCHW"))
    h = jnp.maximum(h + b1[None, :, None, None], 0.0)
    y = lax.conv_general_dilated(h, w2, (1, 1), [(1, 1), (1, 1)],
                                 dimension_numbers=("NCHW", "HWIO", "NCHW"))
    return ten_input_nchw + y + b2[None, :, None, None]


def init_params(key):
    k1, k2, k3, k4 = jax.random.split(key, 4)
    w1 = 0.1 * jax.random.normal(k1, (K, K, C_CAT, C_HID), jnp.float32)
    b1 = 0.01 * jax.random.normal(k2, (C_HID,), jnp.float32)
    w2 = 0.1 * jax.random.normal(k3, (K, K, C_HID, C_OUT), jnp.float32)
    b2 = 0.01 * jax.random.normal(k4, (C_OUT,), jnp.float32)
    return (w1, b1, w2, b2)


if __name__ == "__main__":
    key = jax.random.PRNGKey(0)
    kp, ki, kr = jax.random.split(key, 3)

    params = init_params(kp)

    N, C, H, W = 2, C_IN, 16, 16
    ten_input = jax.random.normal(ki, (N, C, H, W), jnp.float32)
    ten_ref = jax.random.normal(kr, (N, C, H, W), jnp.float32)

    out = model_forward(ten_input, ten_ref, params)
    out = jax.block_until_ready(out)

    ref = _reference_forward(ten_input, ten_ref, params)
    assert out.shape == (N, C, H, W)
    assert jnp.allclose(out, ref, atol=1e-4, rtol=1e-4), "mismatch vs reference"

    print("KERNEL_OK")
</pallas_src>

<mosaic_0001>
module attributes {stable_mosaic.version = 11 : i64} {
  func.func @kernel(%arg0: i32, %arg1: memref<4x512xf32, #tpu.memory_space<vmem>>, %arg2: memref<4x512xf32, #tpu.memory_space<vmem>>, %arg3: memref<16x80xf32, #tpu.memory_space<vmem>>, %arg4: memref<4x152xf32, #tpu.memory_space<vmem>>, %arg5: memref<4x512xf32, #tpu.memory_space<vmem>>, %arg6: memref<80x512xf32, #tpu.memory_space<vmem>>, %arg7: memref<152x512xf32, #tpu.memory_space<vmem>>) attributes {dimension_semantics = [#tpu.dimension_semantics<parallel>], iteration_bounds = array<i64: 1>, scalar_prefetch = 0 : i64, scratch_operands = 2 : i64, tpu.core_type = #tpu.core_type<tc>, window_params = [{transform_indices = @transform_0, window_bounds = array<i64: 4, 512>}, {transform_indices = @transform_1, window_bounds = array<i64: 4, 512>}, {pipeline_mode = #tpu.pipeline_mode<synchronous>, transform_indices = @transform_2, window_bounds = array<i64: 16, 80>}, {pipeline_mode = #tpu.pipeline_mode<synchronous>, transform_indices = @transform_3, window_bounds = array<i64: 4, 152>}, {transform_indices = @transform_4, window_bounds = array<i64: 4, 512>}]} {
    %c0 = arith.constant 0 : index
    %c0_0 = arith.constant 0 : index
    %0 = vector.load %arg1[%c0, %c0_0] : memref<4x512xf32, #tpu.memory_space<vmem>>, vector<4x512xf32>
    %c0_1 = arith.constant 0 : index
    %c0_2 = arith.constant 0 : index
    %1 = vector.load %arg2[%c0_1, %c0_2] : memref<4x512xf32, #tpu.memory_space<vmem>>, vector<4x512xf32>
    %2 = tpu.concatenate %0, %1 in 0 : vector<4x512xf32>, vector<4x512xf32> -> vector<8x512xf32>
    %3 = tpu.iota {dimensions = array<i32: 1>} : vector<1x512xi32>
    %c256_i32 = arith.constant 256 : i32
    %c0_i32 = arith.constant 0 : i32
    %4 = arith.cmpi eq, %c256_i32, %c0_i32 : i32
    %c1_i32 = arith.constant 1 : i32
    %5 = arith.select %4, %c1_i32, %c256_i32 : i32
    %6 = vector.broadcast %5 : i32 to vector<1x512xi32>
    %7 = arith.remsi %3, %6 : vector<1x512xi32>
    %c0_i32_3 = arith.constant 0 : i32
    %8 = vector.broadcast %c0_i32_3 : i32 to vector<1x512xi32>
    %9 = arith.cmpi ne, %7, %8 : vector<1x512xi32>
    %c0_i32_4 = arith.constant 0 : i32
    %10 = vector.broadcast %c0_i32_4 : i32 to vector<1x512xi32>
    %11 = arith.cmpi slt, %7, %10 : vector<1x512xi32>
    %c0_i32_5 = arith.constant 0 : i32
    %12 = arith.cmpi slt, %5, %c0_i32_5 : i32
    %13 = vector.broadcast %12 : i1 to vector<1x512xi1>
    %14 = vector.broadcast %13 : vector<1x512xi1> to vector<1x512xi1>
    %15 = arith.xori %11, %14 : vector<1x512xi1>
    %16 = arith.andi %15, %9 : vector<1x512xi1>
    %17 = vector.broadcast %5 : i32 to vector<1x512xi32>
    %18 = arith.addi %7, %17 : vector<1x512xi32>
    %19 = arith.select %16, %18, %7 : vector<1x512xi1>, vector<1x512xi32>
    %c16_i32 = arith.constant 16 : i32
    %c0_i32_6 = arith.constant 0 : i32
    %20 = arith.cmpi eq, %c16_i32, %c0_i32_6 : i32
    %c1_i32_7 = arith.constant 1 : i32
    %21 = arith.select %20, %c1_i32_7, %c16_i32 : i32
    %22 = vector.broadcast %21 : i32 to vector<1x512xi32>
    %23 = arith.remsi %3, %22 : vector<1x512xi32>
    %c0_i32_8 = arith.constant 0 : i32
    %24 = vector.broadcast %c0_i32_8 : i32 to vector<1x512xi32>
    %25 = arith.cmpi ne, %23, %24 : vector<1x512xi32>
    %c0_i32_9 = arith.constant 0 : i32
    %26 = vector.broadcast %c0_i32_9 : i32 to vector<1x512xi32>
    %27 = arith.cmpi slt, %23, %26 : vector<1x512xi32>
    %c0_i32_10 = arith.constant 0 : i32
    %28 = arith.cmpi slt, %21, %c0_i32_10 : i32
    %29 = vector.broadcast %28 : i1 to vector<1x512xi1>
    %30 = vector.broadcast %29 : vector<1x512xi1> to vector<1x512xi1>
    %31 = arith.xori %27, %30 : vector<1x512xi1>
    %32 = arith.andi %31, %25 : vector<1x512xi1>
    %33 = vector.broadcast %21 : i32 to vector<1x512xi32>
    %34 = arith.addi %23, %33 : vector<1x512xi32>
    %35 = arith.select %32, %34, %23 : vector<1x512xi1>, vector<1x512xi32>
    %c16_i32_11 = arith.constant 16 : i32
    %36 = vector.broadcast %c16_i32_11 : i32 to vector<1x512xi32>
    %37 = arith.cmpi sge, %19, %36 : vector<1x512xi32>
    %c240_i32 = arith.constant 240 : i32
    %38 = vector.broadcast %c240_i32 : i32 to vector<1x512xi32>
    %39 = arith.cmpi slt, %19, %38 : vector<1x512xi32>
    %c0_i32_12 = arith.constant 0 : i32
    %40 = vector.broadcast %c0_i32_12 : i32 to vector<1x512xi32>
    %41 = arith.cmpi ne, %35, %40 : vector<1x512xi32>
    %c15_i32 = arith.constant 15 : i32
    %42 = vector.broadcast %c15_i32 : i32 to vector<1x512xi32>
    %43 = arith.cmpi ne, %35, %42 : vector<1x512xi32>
    %c17_i32 = arith.constant 17 : i32
    %44 = tpu.dynamic_rotate %2 by %c17_i32 dim 1 : vector<8x512xf32>, i32 -> vector<8x512xf32>
    %45 = arith.andi %37, %41 : vector<1x512xi1>
    %cst = arith.constant 0.000000e+00 : f32
    %46 = vector.shape_cast %45 : vector<1x512xi1> to vector<1x512xi1>
    %47 = vector.broadcast %46 : vector<1x512xi1> to vector<8x512xi1>
    %48 = vector.broadcast %cst : f32 to vector<8x512xf32>
    %49 = arith.select %47, %44, %48 : vector<8x512xi1>, vector<8x512xf32>
    %c0_13 = arith.constant 0 : index
    %c0_14 = arith.constant 0 : index
    %50 = vector.load %arg6[%c0_13, %c0_14] : memref<80x512xf32, #tpu.memory_space<vmem>>, vector<8x512xf32>
    tpu.vector_store %arg6[%c0_13, %c0_14], %49 {strides = array<i32>} : memref<80x512xf32, #tpu.memory_space<vmem>>, vector<8x512xf32>,
    %c16_i32_15 = arith.constant 16 : i32
    %51 = tpu.dynamic_rotate %2 by %c16_i32_15 dim 1 : vector<8x512xf32>, i32 -> vector<8x512xf32>
    %cst_16 = arith.constant 0.000000e+00 : f32
    %52 = vector.shape_cast %37 : vector<1x512xi1> to vector<1x512xi1>
    %53 = vector.broadcast %52 : vector<1x512xi1> to vector<8x512xi1>
    %54 = vector.broadcast %cst_16 : f32 to vector<8x512xf32>
    %55 = arith.select %53, %51, %54 : vector<8x512xi1>, vector<8x512xf32>
    %c8 = arith.constant 8 : index
    %c0_17 = arith.constant 0 : index
    %56 = vector.load %arg6[%c8, %c0_17] : memref<80x512xf32, #tpu.memory_space<vmem>>, vector<8x512xf32>
    tpu.vector_store %arg6[%c8, %c0_17], %55 {strides = array<i32>} : memref<80x512xf32, #tpu.memory_space<vmem>>, vector<8x512xf32>,
    %c15_i32_18 = arith.constant 15 : i32
    %57 = tpu.dynamic_rotate %2 by %c15_i32_18 dim 1 : vector<8x512xf32>, i32 -> vector<8x512xf32>
    %58 = arith.andi %37, %43 : vector<1x512xi1>
    %cst_19 = arith.constant 0.000000e+00 : f32
    %59 = vector.shape_cast %58 : vector<1x512xi1> to vector<1x512xi1>
    %60 = vector.broadcast %59 : vector<1x512xi1> to vector<8x512xi1>
    %61 = vector.broadcast %cst_19 : f32 to vector<8x512xf32>
    %62 = arith.select %60, %57, %61 : vector<8x512xi1>, vector<8x512xf32>
    %c16 = arith.constant 16 : index
    %c0_20 = arith.constant 0 : index
    %63 = vector.load %arg6[%c16, %c0_20] : memref<80x512xf32, #tpu.memory_space<vmem>>, vector<8x512xf32>
    tpu.vector_store %arg6[%c16, %c0_20], %62 {strides = array<i32>} : memref<80x512xf32, #tpu.memory_space<vmem>>, vector<8x512xf32>,
    %c1_i32_21 = arith.constant 1 : i32
    %64 = tpu.dynamic_rotate %2 by %c1_i32_21 dim 1 : vector<8x512xf32>, i32 -> vector<8x512xf32>
    %cst_22 = arith.constant 0.000000e+00 : f32
    %65 = vector.shape_cast %41 : vector<1x512xi1> to vector<1x512xi1>
    %66 = vector.broadcast %65 : vector<1x512xi1> to vector<8x512xi1>
    %67 = vector.broadcast %cst_22 : f32 to vector<8x512xf32>
    %68 = arith.select %66, %64, %67 : vector<8x512xi1>, vector<8x512xf32>
    %c24 = arith.constant 24 : index
    %c0_23 = arith.constant 0 : index
    %69 = vector.load %arg6[%c24, %c0_23] : memref<80x512xf32, #tpu.memory_space<vmem>>, vector<8x512xf32>
    tpu.vector_store %arg6[%c24, %c0_23], %68 {strides = array<i32>} : memref<80x512xf32, #tpu.memory_space<vmem>>, vector<8x512xf32>,
    %c32 = arith.constant 32 : index
    %c0_24 = arith.constant 0 : index
    %70 = vector.load %arg6[%c32, %c0_24] : memref<80x512xf32, #tpu.memory_space<vmem>>, vector<8x512xf32>
    tpu.vector_store %arg6[%c32, %c0_24], %2 {strides = array<i32>} : memref<80x512xf32, #tpu.memory_space<vmem>>, vector<8x512xf32>,
    %c511_i32 = arith.constant 511 : i32
    %71 = tpu.dynamic_rotate %2 by %c511_i32 dim 1 : vector<8x512xf32>, i32 -> vector<8x512xf32>
    %cst_25 = arith.constant 0.000000e+00 : f32
    %72 = vector.shape_cast %43 : vector<1x512xi1> to vector<1x512xi1>
    %73 = vector.broadcast %72 : vector<1x512xi1> to vector<8x512xi1>
    %74 = vector.broadcast %cst_25 : f32 to vector<8x512xf32>
    %75 = arith.select %73, %71, %74 : vector<8x512xi1>, vector<8x512xf32>
    %c40 = arith.constant 40 : index
    %c0_26 = arith.constant 0 : index
    %76 = vector.load %arg6[%c40, %c0_26] : memref<80x512xf32, #tpu.memory_space<vmem>>, vector<8x512xf32>
    tpu.vector_store %arg6[%c40, %c0_26], %75 {strides = array<i32>} : memref<80x512xf32, #tpu.memory_space<vmem>>, vector<8x512xf32>,
    %c497_i32 = arith.constant 497 : i32
    %77 = tpu.dynamic_rotate %2 by %c497_i32 dim 1 : vector<8x512xf32>, i32 -> vector<8x512xf32>
    %78 = arith.andi %39, %41 : vector<1x512xi1>
    %cst_27 = arith.constant 0.000000e+00 : f32
    %79 = vector.shape_cast %78 : vector<1x512xi1> to vector<1x512xi1>
    %80 = vector.broadcast %79 : vector<1x512xi1> to vector<8x512xi1>
    %81 = vector.broadcast %cst_27 : f32 to vector<8x512xf32>
    %82 = arith.select %80, %77, %81 : vector<8x512xi1>, vector<8x512xf32>
    %c48 = arith.constant 48 : index
    %c0_28 = arith.constant 0 : index
    %83 = vector.load %arg6[%c48, %c0_28] : memref<80x512xf32, #tpu.memory_space<vmem>>, vector<8x512xf32>
    tpu.vector_store %arg6[%c48, %c0_28], %82 {strides = array<i32>} : memref<80x512xf32, #tpu.memory_space<vmem>>, vector<8x512xf32>,
    %c496_i32 = arith.constant 496 : i32
    %84 = tpu.dynamic_rotate %2 by %c496_i32 dim 1 : vector<8x512xf32>, i32 -> vector<8x512xf32>
    %cst_29 = arith.constant 0.000000e+00 : f32
    %85 = vector.shape_cast %39 : vector<1x512xi1> to vector<1x512xi1>
    %86 = vector.broadcast %85 : vector<1x512xi1> to vector<8x512xi1>
    %87 = vector.broadcast %cst_29 : f32 to vector<8x512xf32>
    %88 = arith.select %86, %84, %87 : vector<8x512xi1>, vector<8x512xf32>
    %c56 = arith.constant 56 : index
    %c0_30 = arith.constant 0 : index
    %89 = vector.load %arg6[%c56, %c0_30] : memref<80x512xf32, #tpu.memory_space<vmem>>, vector<8x512xf32>
    tpu.vector_store %arg6[%c56, %c0_30], %88 {strides = array<i32>} : memref<80x512xf32, #tpu.memory_space<vmem>>, vector<8x512xf32>,
    %c495_i32 = arith.constant 495 : i32
    %90 = tpu.dynamic_rotate %2 by %c495_i32 dim 1 : vector<8x512xf32>, i32 -> vector<8x512xf32>
    %91 = arith.andi %39, %43 : vector<1x512xi1>
    %cst_31 = arith.constant 0.000000e+00 : f32
    %92 = vector.shape_cast %91 : vector<1x512xi1> to vector<1x512xi1>
    %93 = vector.broadcast %92 : vector<1x512xi1> to vector<8x512xi1>
    %94 = vector.broadcast %cst_31 : f32 to vector<8x512xf32>
    %95 = arith.select %93, %90, %94 : vector<8x512xi1>, vector<8x512xf32>
    %c64 = arith.constant 64 : index
    %c0_32 = arith.constant 0 : index
    %96 = vector.load %arg6[%c64, %c0_32] : memref<80x512xf32, #tpu.memory_space<vmem>>, vector<8x512xf32>
    tpu.vector_store %arg6[%c64, %c0_32], %95 {strides = array<i32>} : memref<80x512xf32, #tpu.memory_space<vmem>>, vector<8x512xf32>,
    %cst_33 = arith.constant 1.000000e+00 : f32
    %97 = vector.broadcast %cst_33 : f32 to vector<8x512xf32>
    %c72 = arith.constant 72 : index
    %c0_34 = arith.constant 0 : index
    %98 = vector.load %arg6[%c72, %c0_34] : memref<80x512xf32, #tpu.memory_space<vmem>>, vector<8x512xf32>
    tpu.vector_store %arg6[%c72, %c0_34], %97 {strides = array<i32>} : memref<80x512xf32, #tpu.memory_space<vmem>>, vector<8x512xf32>,
    %c0_35 = arith.constant 0 : index
    %c0_36 = arith.constant 0 : index
    %99 = vector.load %arg3[%c0_35, %c0_36] : memref<16x80xf32, #tpu.memory_space<vmem>>, vector<16x80xf32>
    %c0_37 = arith.constant 0 : index
    %c0_38 = arith.constant 0 : index
    %100 = vector.load %arg6[%c0_37, %c0_38] : memref<80x512xf32, #tpu.memory_space<vmem>>, vector<80x512xf32>
    %cst_39 = arith.constant dense<0.000000e+00> : vector<16x512xf32>
    %101 = tpu.matmul %99, %100, %cst_39 {dimension_numbers = #tpu.dot_dimension_numbers<[1], [0], [0], [1], [0, 0, 1, 1], [], []>} : vector<16x80xf32>, vector<80x512xf32>, vector<16x512xf32> -> vector<16x512xf32>
    %cst_40 = arith.constant 0.000000e+00 : f32
    %102 = vector.broadcast %cst_40 : f32 to vector<16x512xf32>
    %103 = arith.maximumf %101, %102 : vector<16x512xf32>
    %c17_i32_41 = arith.constant 17 : i32
    %104 = tpu.dynamic_rotate %103 by %c17_i32_41 dim 1 : vector<16x512xf32>, i32 -> vector<16x512xf32>
    %105 = arith.andi %37, %41 : vector<1x512xi1>
    %cst_42 = arith.constant 0.000000e+00 : f32
    %106 = vector.shape_cast %105 : vector<1x512xi1> to vector<1x512xi1>
    %107 = vector.broadcast %106 : vector<1x512xi1> to vector<16x512xi1>
    %108 = vector.broadcast %cst_42 : f32 to vector<16x512xf32>
    %109 = arith.select %107, %104, %108 : vector<16x512xi1>, vector<16x512xf32>
    %c0_43 = arith.constant 0 : index
    %c0_44 = arith.constant 0 : index
    %110 = vector.load %arg7[%c0_43, %c0_44] : memref<152x512xf32, #tpu.memory_space<vmem>>, vector<16x512xf32>
    tpu.vector_store %arg7[%c0_43, %c0_44], %109 {strides = array<i32>} : memref<152x512xf32, #tpu.memory_space<vmem>>, vector<16x512xf32>,
    %c16_i32_45 = arith.constant 16 : i32
    %111 = tpu.dynamic_rotate %103 by %c16_i32_45 dim 1 : vector<16x512xf32>, i32 -> vector<16x512xf32>
    %cst_46 = arith.constant 0.000000e+00 : f32
    %112 = vector.shape_cast %37 : vector<1x512xi1> to vector<1x512xi1>
    %113 = vector.broadcast %112 : vector<1x512xi1> to vector<16x512xi1>
    %114 = vector.broadcast %cst_46 : f32 to vector<16x512xf32>
    %115 = arith.select %113, %111, %114 : vector<16x512xi1>, vector<16x512xf32>
    %c16_47 = arith.constant 16 : index
    %c0_48 = arith.constant 0 : index
    %116 = vector.load %arg7[%c16_47, %c0_48] : memref<152x512xf32, #tpu.memory_space<vmem>>, vector<16x512xf32>
    tpu.vector_store %arg7[%c16_47, %c0_48], %115 {strides = array<i32>} : memref<152x512xf32, #tpu.memory_space<vmem>>, vector<16x512xf32>,
    %c15_i32_49 = arith.constant 15 : i32
    %117 = tpu.dynamic_rotate %103 by %c15_i32_49 dim 1 : vector<16x512xf32>, i32 -> vector<16x512xf32>
    %118 = arith.andi %37, %43 : vector<1x512xi1>
    %cst_50 = arith.constant 0.000000e+00 : f32
    %119 = vector.shape_cast %118 : vector<1x512xi1> to vector<1x512xi1>
    %120 = vector.broadcast %119 : vector<1x512xi1> to vector<16x512xi1>
    %121 = vector.broadcast %cst_50 : f32 to vector<16x512xf32>
    %122 = arith.select %120, %117, %121 : vector<16x512xi1>, vector<16x512xf32>
    %c32_51 = arith.constant 32 : index
    %c0_52 = arith.constant 0 : index
    %123 = vector.load %arg7[%c32_51, %c0_52] : memref<152x512xf32, #tpu.memory_space<vmem>>, vector<16x512xf32>
    tpu.vector_store %arg7[%c32_51, %c0_52], %122 {strides = array<i32>} : memref<152x512xf32, #tpu.memory_space<vmem>>, vector<16x512xf32>,
    %c1_i32_53 = arith.constant 1 : i32
    %124 = tpu.dynamic_rotate %103 by %c1_i32_53 dim 1 : vector<16x512xf32>, i32 -> vector<16x512xf32>
    %cst_54 = arith.constant 0.000000e+00 : f32
    %125 = vector.shape_cast %41 : vector<1x512xi1> to vector<1x512xi1>
    %126 = vector.broadcast %125 : vector<1x512xi1> to vector<16x512xi1>
    %127 = vector.broadcast %cst_54 : f32 to vector<16x512xf32>
    %128 = arith.select %126, %124, %127 : vector<16x512xi1>, vector<16x512xf32>
    %c48_55 = arith.constant 48 : index
    %c0_56 = arith.constant 0 : index
    %129 = vector.load %arg7[%c48_55, %c0_56] : memref<152x512xf32, #tpu.memory_space<vmem>>, vector<16x512xf32>
    tpu.vector_store %arg7[%c48_55, %c0_56], %128 {strides = array<i32>} : memref<152x512xf32, #tpu.memory_space<vmem>>, vector<16x512xf32>,
    %c64_57 = arith.constant 64 : index
    %c0_58 = arith.constant 0 : index
    %130 = vector.load %arg7[%c64_57, %c0_58] : memref<152x512xf32, #tpu.memory_space<vmem>>, vector<16x512xf32>
    tpu.vector_store %arg7[%c64_57, %c0_58], %103 {strides = array<i32>} : memref<152x512xf32, #tpu.memory_space<vmem>>, vector<16x512xf32>,
    %c511_i32_59 = arith.constant 511 : i32
    %131 = tpu.dynamic_rotate %103 by %c511_i32_59 dim 1 : vector<16x512xf32>, i32 -> vector<16x512xf32>
    %cst_60 = arith.constant 0.000000e+00 : f32
    %132 = vector.shape_cast %43 : vector<1x512xi1> to vector<1x512xi1>
    %133 = vector.broadcast %132 : vector<1x512xi1> to vector<16x512xi1>
    %134 = vector.broadcast %cst_60 : f32 to vector<16x512xf32>
    %135 = arith.select %133, %131, %134 : vector<16x512xi1>, vector<16x512xf32>
    %c80 = arith.constant 80 : index
    %c0_61 = arith.constant 0 : index
    %136 = vector.load %arg7[%c80, %c0_61] : memref<152x512xf32, #tpu.memory_space<vmem>>, vector<16x512xf32>
    tpu.vector_store %arg7[%c80, %c0_61], %135 {strides = array<i32>} : memref<152x512xf32, #tpu.memory_space<vmem>>, vector<16x512xf32>,
    %c497_i32_62 = arith.constant 497 : i32
    %137 = tpu.dynamic_rotate %103 by %c497_i32_62 dim 1 : vector<16x512xf32>, i32 -> vector<16x512xf32>
    %138 = arith.andi %39, %41 : vector<1x512xi1>
    %cst_63 = arith.constant 0.000000e+00 : f32
    %139 = vector.shape_cast %138 : vector<1x512xi1> to vector<1x512xi1>
    %140 = vector.broadcast %139 : vector<1x512xi1> to vector<16x512xi1>
    %141 = vector.broadcast %cst_63 : f32 to vector<16x512xf32>
    %142 = arith.select %140, %137, %141 : vector<16x512xi1>, vector<16x512xf32>
    %c96 = arith.constant 96 : index
    %c0_64 = arith.constant 0 : index
    %143 = vector.load %arg7[%c96, %c0_64] : memref<152x512xf32, #tpu.memory_space<vmem>>, vector<16x512xf32>
    tpu.vector_store %arg7[%c96, %c0_64], %142 {strides = array<i32>} : memref<152x512xf32, #tpu.memory_space<vmem>>, vector<16x512xf32>,
    %c496_i32_65 = arith.constant 496 : i32
    %144 = tpu.dynamic_rotate %103 by %c496_i32_65 dim 1 : vector<16x512xf32>, i32 -> vector<16x512xf32>
    %cst_66 = arith.constant 0.000000e+00 : f32
    %145 = vector.shape_cast %39 : vector<1x512xi1> to vector<1x512xi1>
    %146 = vector.broadcast %145 : vector<1x512xi1> to vector<16x512xi1>
    %147 = vector.broadcast %cst_66 : f32 to vector<16x512xf32>
    %148 = arith.select %146, %144, %147 : vector<16x512xi1>, vector<16x512xf32>
    %c112 = arith.constant 112 : index
    %c0_67 = arith.constant 0 : index
    %149 = vector.load %arg7[%c112, %c0_67] : memref<152x512xf32, #tpu.memory_space<vmem>>, vector<16x512xf32>
    tpu.vector_store %arg7[%c112, %c0_67], %148 {strides = array<i32>} : memref<152x512xf32, #tpu.memory_space<vmem>>, vector<16x512xf32>,
    %c495_i32_68 = arith.constant 495 : i32
    %150 = tpu.dynamic_rotate %103 by %c495_i32_68 dim 1 : vector<16x512xf32>, i32 -> vector<16x512xf32>
    %151 = arith.andi %39, %43 : vector<1x512xi1>
    %cst_69 = arith.constant 0.000000e+00 : f32
    %152 = vector.shape_cast %151 : vector<1x512xi1> to vector<1x512xi1>
    %153 = vector.broadcast %152 : vector<1x512xi1> to vector<16x512xi1>
    %154 = vector.broadcast %cst_69 : f32 to vector<16x512xf32>
    %155 = arith.select %153, %150, %154 : vector<16x512xi1>, vector<16x512xf32>
    %c128 = arith.constant 128 : index
    %c0_70 = arith.constant 0 : index
    %156 = vector.load %arg7[%c128, %c0_70] : memref<152x512xf32, #tpu.memory_space<vmem>>, vector<16x512xf32>
    tpu.vector_store %arg7[%c128, %c0_70], %155 {strides = array<i32>} : memref<152x512xf32, #tpu.memory_space<vmem>>, vector<16x512xf32>,
    %cst_71 = arith.constant 1.000000e+00 : f32
    %157 = vector.broadcast %cst_71 : f32 to vector<8x512xf32>
    %c144 = arith.constant 144 : index
    %c0_72 = arith.constant 0 : index
    %158 = vector.load %arg7[%c144, %c0_72] : memref<152x512xf32, #tpu.memory_space<vmem>>, vector<8x512xf32>
    tpu.vector_store %arg7[%c144, %c0_72], %157 {strides = array<i32>} : memref<152x512xf32, #tpu.memory_space<vmem>>, vector<8x512xf32>,
    %c0_73 = arith.constant 0 : index
    %c0_74 = arith.constant 0 : index
    %159 = vector.load %arg4[%c0_73, %c0_74] : memref<4x152xf32, #tpu.memory_space<vmem>>, vector<4x152xf32>
    %c0_75 = arith.constant 0 : index
    %c0_76 = arith.constant 0 : index
    %160 = vector.load %arg7[%c0_75, %c0_76] : memref<152x512xf32, #tpu.memory_space<vmem>>, vector<152x512xf32>
    %cst_77 = arith.constant dense<0.000000e+00> : vector<4x512xf32>
    %161 = tpu.matmul %159, %160, %cst_77 {dimension_numbers = #tpu.dot_dimension_numbers<[1], [0], [0], [1], [0, 0, 1, 1], [], []>} : vector<4x152xf32>, vector<152x512xf32>, vector<4x512xf32> -> vector<4x512xf32>
    %162 = arith.addf %161, %0 : vector<4x512xf32>
    %c0_78 = arith.constant 0 : index
    %c0_79 = arith.constant 0 : index
    %163 = vector.load %arg5[%c0_78, %c0_79] : memref<4x512xf32, #tpu.memory_space<vmem>>, vector<4x512xf32>
    tpu.vector_store %arg5[%c0_78, %c0_79], %162 {strides = array<i32>} : memref<4x512xf32, #tpu.memory_space<vmem>>, vector<4x512xf32>,
    return
  }
  func.func @transform_0(%arg0: i32) -> (i32, i32) {
    %c0_i32 = arith.constant 0 : i32
    %c0_i32_0 = arith.constant 0 : i32
    return %c0_i32, %arg0 : i32, i32
  }
  func.func @transform_1(%arg0: i32) -> (i32, i32) {
    %c0_i32 = arith.constant 0 : i32
    %c0_i32_0 = arith.constant 0 : i32
    return %c0_i32, %arg0 : i32, i32
  }
  func.func @transform_2(%arg0: i32) -> (i32, i32) {
    %c0_i32 = arith.constant 0 : i32
    %c0_i32_0 = arith.constant 0 : i32
    %c0_i32_1 = arith.constant 0 : i32
    return %c0_i32, %c0_i32_0 : i32, i32
  }
  func.func @transform_3(%arg0: i32) -> (i32, i32) {
    %c0_i32 = arith.constant 0 : i32
    %c0_i32_0 = arith.constant 0 : i32
    %c0_i32_1 = arith.constant 0 : i32
    return %c0_i32, %c0_i32_0 : i32, i32
  }
  func.func @transform_4(%arg0: i32) -> (i32, i32) {
    %c0_i32 = arith.constant 0 : i32
    %c0_i32_0 = arith.constant 0 : i32
    return %c0_i32, %arg0 : i32, i32
  }
}

</mosaic_0001>

<llo_original>
// kernel: tpu_custom_call.1
$region0: #{tpu_custom_call.1}
  #allocation0 [shape = 'u32[]', space=smem, size = 0x4, offset = 0x4, fixed_abs, tag = 'smem constant byte address 0x4 - core index']
  #allocation1 [shape = 'u32[144,128]{1,0:T(1,128)}', space=vmem, size = 0x12000, scoped, tag = 'internal scratch']
  #allocation2 [shape = 'f32[80,512]{1,0:T(8,128)}', space=vmem, size = 0x28000, scoped, tag = 'scratch operand']
  #allocation3 [shape = 'f32[152,512]{1,0:T(8,128)}', space=vmem, size = 0x4c000, scoped, tag = 'scratch operand']
  %s0 = inlined_call_operand.hbm [shape: f32[4,512], index: 0, kind: input, shape index: {}]
  %s1 = inlined_call_operand.hbm [shape: f32[4,512], index: 1, kind: input, shape index: {}]
  %s2 = inlined_call_operand.hbm [shape: f32[16,80], index: 2, kind: input, shape index: {}]
  %s3 = inlined_call_operand.vmem [shape: f32[4,152], index: 3, kind: input, shape index: {}]
  %s4 = inlined_call_operand.hbm [shape: f32[4,512], index: 4, kind: output, shape index: {}]
  %s5 = sld [smem:[#allocation0]]
  $region38: #{tpu_custom_call.1} parent=0
    _
  %s7 = ssub.s32 1, %s5
  %s8 = scalar_select 0, %s7, %s5
  $region1: #{tpu_custom_call.1} parent=0
    #allocation4 [shape = 'u8[8192]{0}', space=vmem, size = 0x2000, scoped, tag = 'input window, operand 0, single buffered']
    #allocation5 [shape = 's32[1]{0}', space=sflag, size = 0x4, scoped, tag = 'scoped memory for tpu_custom_call.1']
    #allocation6 [shape = 's32[1]{0}', space=sflag, size = 0x4, scoped, tag = 'scoped memory for tpu_custom_call.1']
    #allocation7 [shape = 'u8[8192]{0}', space=vmem, size = 0x2000, scoped, tag = 'input window, operand 1, single buffered']
    #allocation8 [shape = 's32[1]{0}', space=sflag, size = 0x4, scoped, tag = 'scoped memory for tpu_custom_call.1']
    #allocation9 [shape = 'u8[8192]{0}', space=vmem, size = 0x2000, scoped, tag = 'input window, operand 2, single buffered']
    #allocation10 [shape = 'u8[8192]{0}', space=vmem, size = 0x2000, scoped, tag = 'output window, operand 0, single buffered']
    %9 = vsyncpa [#allocation5], 0
    %10 = vsyncpa [#allocation8], 0
    %11 = vsyncpa [#allocation6], 0
    // Predicated region
    $region2: #{tpu_custom_call.1} parent=1 // pred_check
      _
    $region3: #{tpu_custom_call.1} parent=1 // pred_check_branch
      %13 = sbr.rel (0) target = $region5
    $region4: #{tpu_custom_call.1} parent=1 // pred_region
      %s15 = ssub.s32 256, 256
      %16 = vsyncadd [#allocation5], %s15
      %s18 = sshll.u32 [#allocation4], 4
      %s19 = int_to_ptr.vmem [resolvable:$true] %s18
      %21 = dma.hbm_to_vmem [thread:$0]  %s0, 256, %s19, [#allocation5]
    $region5: #{tpu_custom_call.1} parent=1 // pred_fallthru
      _
    // Predicated region
    $region6: #{tpu_custom_call.1} parent=1 // pred_check
      _
    $region7: #{tpu_custom_call.1} parent=1 // pred_check_branch
      %23 = sbr.rel (0) target = $region9
    $region8: #{tpu_custom_call.1} parent=1 // pred_region
      %s25 = ssub.s32 256, 256
      %26 = vsyncadd [#allocation8], %s25
      %s28 = sshll.u32 [#allocation7], 4
      %s29 = int_to_ptr.vmem [resolvable:$true] %s28
      %31 = dma.hbm_to_vmem [thread:$0]  %s1, 256, %s29, [#allocation8]
    $region9: #{tpu_custom_call.1} parent=1 // pred_fallthru
      _
    // Predicated region
    $region10: #{tpu_custom_call.1} parent=1 // pred_check
      _
    $region11: #{tpu_custom_call.1} parent=1 // pred_check_branch
      %33 = sbr.rel (0) target = $region13
    $region12: #{tpu_custom_call.1} parent=1 // pred_region
      %s35 = ssub.s32 256, 256
      %36 = vsyncadd [#allocation8], %s35
      %s37 = sshll.u32 [#allocation9], 4
      %s38 = int_to_ptr.vmem [resolvable:$true] %s37
      %43 = dma.hbm_to_vmem [thread:$0]  %s2, 256, %s38, [#allocation8], 128, 128, 8
    $region13: #{tpu_custom_call.1} parent=1 // pred_fallthru
      _
    // Predicated region
    $region14: #{tpu_custom_call.1} parent=1 // pred_check
      _
    $region15: #{tpu_custom_call.1} parent=1 // pred_check_branch
      %45 = sbr.rel (0) target = $region17
    $region16: #{tpu_custom_call.1} parent=1 // pred_region
      _
    $region17: #{tpu_custom_call.1} parent=1 // pred_fallthru
      _
    // Predicated region
    $region18: #{tpu_custom_call.1} parent=1 // pred_check
      _
    $region19: #{tpu_custom_call.1} parent=1 // pred_check_branch
      %47 = sbr.rel (0) target = $region21
    $region20: #{tpu_custom_call.1} parent=1 // pred_region
      %48 = dma.done [#allocation5], 256
    $region21: #{tpu_custom_call.1} parent=1 // pred_fallthru
      _
    // Predicated region
    $region22: #{tpu_custom_call.1} parent=1 // pred_check
      _
    $region23: #{tpu_custom_call.1} parent=1 // pred_check_branch
      %50 = sbr.rel (0) target = $region25
    $region24: #{tpu_custom_call.1} parent=1 // pred_region
      %51 = dma.done [#allocation8], 256
    $region25: #{tpu_custom_call.1} parent=1 // pred_fallthru
      _
    // Predicated region
    $region26: #{tpu_custom_call.1} parent=1 // pred_check
      _
    $region27: #{tpu_custom_call.1} parent=1 // pred_check_branch
      %53 = sbr.rel (0) target = $region29
    $region28: #{tpu_custom_call.1} parent=1 // pred_region
      %54 = dma.done [#allocation8], 256
    $region29: #{tpu_custom_call.1} parent=1 // pred_fallthru
      _
    %v55 = vld [vmem:[#allocation4] sm:$0xff]
    %v56 = vld [vmem:[#allocation4 + $0x8] sm:$0xff]
    %v57 = vld [vmem:[#allocation7] sm:$0xff]
    %v58 = vld [vmem:[#allocation7 + $0x8] sm:$0xff]
    %v61 = vcombine.high %v55, %v55
    %v62 = vcombine.high %v56, %v56
    %v67 = vcombine.low %v57, %v57
    %v68 = vcombine.low %v58, %v58
    %vm71 = vcmask 1043456
    %v72 = vsel %vm71, %v55, %v67
    %v73 = vsel %vm71, %v61, %v57
    %v74 = vsel %vm71, %v56, %v68
    %v75 = vsel %vm71, %v62, %v58
    %v76 = vlaneseq
    %v77 = vand.u32 %v76, 127
    %v78 = vadd.s32 %v77, 128
    %v79 = vadd.s32 %v77, 256
    %v80 = vadd.s32 %v77, 384
    %vm81 = vcmp.lt.s32.totalorder %v77, 0
    %v82 = vsub.s32 0, %v77
    %v83 = vsel %vm81, %v82, %v77
    %v84 = vshrl.u32 %v83, 8
    %v85 = vand.u32 %v83, 255
    %v86 = vsub.s32 0, %v85
    %v87 = vsel %vm81, %v86, %v85
    %vm88 = vcmp.lt.s32.totalorder %v78, 0
    %v89 = vsub.s32 0, %v78
    %v90 = vsel %vm88, %v89, %v78
    %v91 = vshrl.u32 %v90, 8
    %v92 = vand.u32 %v90, 255
    %v93 = vsub.s32 0, %v92
    %v94 = vsel %vm88, %v93, %v92
    %vm95 = vcmp.lt.s32.totalorder %v79, 0
    %v96 = vsub.s32 0, %v79
    %v97 = vsel %vm95, %v96, %v79
    %v98 = vshrl.u32 %v97, 8
    %v99 = vand.u32 %v97, 255
    %v100 = vsub.s32 0, %v99
    %v101 = vsel %vm95, %v100, %v99
    %vm102 = vcmp.lt.s32.totalorder %v80, 0
    %v103 = vsub.s32 0, %v80
    %v104 = vsel %vm102, %v103, %v80
    %v105 = vshrl.u32 %v104, 8
    %v106 = vand.u32 %v104, 255
    %v107 = vsub.s32 0, %v106
    %v108 = vsel %vm102, %v107, %v106
    %vm109 = vcmp.ne.s32.totalorder %v87, 0
    %vm110 = vcmp.ne.s32.totalorder %v94, 0
    %vm111 = vcmp.ne.s32.totalorder %v101, 0
    %vm112 = vcmp.ne.s32.totalorder %v108, 0
    %vm113 = vcmp.lt.s32.totalorder %v87, 0
    %vm114 = vcmp.lt.s32.totalorder %v94, 0
    %vm115 = vcmp.lt.s32.totalorder %v101, 0
    %vm116 = vcmp.lt.s32.totalorder %v108, 0
    %vm117 = vmand %vm113, %vm109
    %vm118 = vmand %vm114, %vm110
    %vm119 = vmand %vm115, %vm111
    %vm120 = vmand %vm116, %vm112
    %v121 = vadd.s32 %v87, 256
    %v122 = vadd.s32 %v94, 256
    %v123 = vadd.s32 %v101, 256
    %v124 = vadd.s32 %v108, 256
    %v125 = vsel %vm117, %v121, %v87
    %v126 = vsel %vm118, %v122, %v94
    %v127 = vsel %vm119, %v123, %v101
    %v128 = vsel %vm120, %v124, %v108
    %vm129 = vcmp.lt.s32.totalorder %v77, 0
    %v130 = vsub.s32 0, %v77
    %v131 = vsel %vm129, %v130, %v77
    %v132 = vshrl.u32 %v131, 4
    %v133 = vand.u32 %v131, 15
    %v134 = vsub.s32 0, %v133
    %v135 = vsel %vm129, %v134, %v133
    %vm136 = vcmp.lt.s32.totalorder %v78, 0
    %v137 = vsub.s32 0, %v78
    %v138 = vsel %vm136, %v137, %v78
    %v139 = vshrl.u32 %v138, 4
    %v140 = vand.u32 %v138, 15
    %v141 = vsub.s32 0, %v140
    %v142 = vsel %vm136, %v141, %v140
    %vm143 = vcmp.lt.s32.totalorder %v79, 0
    %v144 = vsub.s32 0, %v79
    %v145 = vsel %vm143, %v144, %v79
    %v146 = vshrl.u32 %v145, 4
    %v147 = vand.u32 %v145, 15
    %v148 = vsub.s32 0, %v147
    %v149 = vsel %vm143, %v148, %v147
    %vm150 = vcmp.lt.s32.totalorder %v80, 0
    %v151 = vsub.s32 0, %v80
    %v152 = vsel %vm150, %v151, %v80
    %v153 = vshrl.u32 %v152, 4
    %v154 = vand.u32 %v152, 15
    %v155 = vsub.s32 0, %v154
    %v156 = vsel %vm150, %v155, %v154
    %vm157 = vcmp.ne.s32.totalorder %v135, 0
    %vm158 = vcmp.ne.s32.totalorder %v142, 0
    %vm159 = vcmp.ne.s32.totalorder %v149, 0
    %vm160 = vcmp.ne.s32.totalorder %v156, 0
    %vm161 = vcmp.lt.s32.totalorder %v135, 0
    %vm162 = vcmp.lt.s32.totalorder %v142, 0
    %vm163 = vcmp.lt.s32.totalorder %v149, 0
    %vm164 = vcmp.lt.s32.totalorder %v156, 0
    %vm165 = vmand %vm161, %vm157
    %vm166 = vmand %vm162, %vm158
    %vm167 = vmand %vm163, %vm159
    %vm168 = vmand %vm164, %vm160
    %v169 = vadd.s32 %v135, 16
    %v170 = vadd.s32 %v142, 16
    %v171 = vadd.s32 %v149, 16
    %v172 = vadd.s32 %v156, 16
    %v173 = vsel %vm165, %v169, %v135
    %v174 = vsel %vm166, %v170, %v142
    %v175 = vsel %vm167, %v171, %v149
    %v176 = vsel %vm168, %v172, %v156
    %vm177 = vcmp.ge.s32.totalorder %v125, 16
    %vm178 = vcmp.ge.s32.totalorder %v126, 16
    %vm179 = vcmp.ge.s32.totalorder %v127, 16
    %vm180 = vcmp.ge.s32.totalorder %v128, 16
    %vm181 = vcmp.lt.s32.totalorder %v125, 240
    %vm182 = vcmp.lt.s32.totalorder %v126, 240
    %vm183 = vcmp.lt.s32.totalorder %v127, 240
    %vm184 = vcmp.lt.s32.totalorder %v128, 240
    %vm185 = vcmp.ne.s32.totalorder %v173, 0
    %vm186 = vcmp.ne.s32.totalorder %v174, 0
    %vm187 = vcmp.ne.s32.totalorder %v175, 0
    %vm188 = vcmp.ne.s32.totalorder %v176, 0
    %vm189 = vcmp.ne.s32.totalorder %v173, 15
    %vm190 = vcmp.ne.s32.totalorder %v174, 15
    %vm191 = vcmp.ne.s32.totalorder %v175, 15
    %vm192 = vcmp.ne.s32.totalorder %v176, 15
    %193 = vrot.lane.b32.xlu0 %v72, 17
    %v194 = vpop.permute.xlu0 %193
    %195 = vrot.lane.b32.xlu0 %v73, 17
    %v196 = vpop.permute.xlu0 %195
    %197 = vrot.lane.b32.xlu0 %v74, 17
    %v198 = vpop.permute.xlu0 %197
    %199 = vrot.lane.b32.xlu0 %v75, 17
    %v200 = vpop.permute.xlu0 %199
    %vm201 = vcmp.lt.s32.totalorder %v77, 17
    %v202 = vsel %vm201, %v198, %v200
    %v203 = vsel %vm201, %v196, %v198
    %v204 = vsel %vm201, %v194, %v196
    %v205 = vsel %vm201, %v200, %v194
    %vm206 = vmand %vm177, %vm185
    %vm207 = vmand %vm178, %vm186
    %vm208 = vmand %vm179, %vm187
    %vm209 = vmand %vm180, %vm188
    %v210 = vsel %vm206, 1, 0
    %v211 = vsel %vm207, 1, 0
    %v212 = vsel %vm208, 1, 0
    %v213 = vsel %vm209, 1, 0
    %vm214 = vcmp.eq.s32.totalorder %v210, 1
    %vm215 = vcmp.eq.s32.totalorder %v211, 1
    %vm216 = vcmp.eq.s32.totalorder %v212, 1
    %vm217 = vcmp.eq.s32.totalorder %v213, 1
    %v218 = vsel %vm214, %v205, 0.0
    %v219 = vsel %vm215, %v204, 0.0
    %v220 = vsel %vm216, %v203, 0.0
    %v221 = vsel %vm217, %v202, 0.0
    %222 = vst [vmem:[#allocation2] sm:$0xff] %v218
    %223 = vst [vmem:[#allocation2 + $0x8] sm:$0xff] %v219
    %224 = vst [vmem:[#allocation2 + $0x10] sm:$0xff] %v220
    %225 = vst [vmem:[#allocation2 + $0x18] sm:$0xff] %v221
    %226 = vrot.lane.b32.xlu0 %v72, 16
    %v227 = vpop.permute.xlu0 %226
    %228 = vrot.lane.b32.xlu0 %v73, 16
    %v229 = vpop.permute.xlu0 %228
    %230 = vrot.lane.b32.xlu0 %v74, 16
    %v231 = vpop.permute.xlu0 %230
    %232 = vrot.lane.b32.xlu0 %v75, 16
    %v233 = vpop.permute.xlu0 %232
    %vm234 = vcmp.lt.s32.totalorder %v77, 16
    %v235 = vsel %vm234, %v231, %v233
    %v236 = vsel %vm234, %v229, %v231
    %v237 = vsel %vm234, %v227, %v229
    %v238 = vsel %vm234, %v233, %v227
    %v239 = vsel %vm177, 1, 0
    %v240 = vsel %vm178, 1, 0
    %v241 = vsel %vm179, 1, 0
    %v242 = vsel %vm180, 1, 0
    %vm243 = vcmp.eq.s32.totalorder %v239, 1
    %vm244 = vcmp.eq.s32.totalorder %v240, 1
    %vm245 = vcmp.eq.s32.totalorder %v241, 1
    %vm246 = vcmp.eq.s32.totalorder %v242, 1
    %v247 = vsel %vm243, %v238, 0.0
    %v248 = vsel %vm244, %v237, 0.0
    %v249 = vsel %vm245, %v236, 0.0
    %v250 = vsel %vm246, %v235, 0.0
    %251 = vst [vmem:[#allocation2 + $0x20] sm:$0xff] %v247
    %252 = vst [vmem:[#allocation2 + $0x28] sm:$0xff] %v248
    %253 = vst [vmem:[#allocation2 + $0x30] sm:$0xff] %v249
    %254 = vst [vmem:[#allocation2 + $0x38] sm:$0xff] %v250
    %255 = vrot.lane.b32.xlu0 %v72, 15
    %v256 = vpop.permute.xlu0 %255
    %257 = vrot.lane.b32.xlu0 %v73, 15
    %v258 = vpop.permute.xlu0 %257
    %259 = vrot.lane.b32.xlu0 %v74, 15
    %v260 = vpop.permute.xlu0 %259
    %261 = vrot.lane.b32.xlu0 %v75, 15
    %v262 = vpop.permute.xlu0 %261
    %vm263 = vcmp.lt.s32.totalorder %v77, 15
    %v264 = vsel %vm263, %v260, %v262
    %v265 = vsel %vm263, %v258, %v260
    %v266 = vsel %vm263, %v256, %v258
    %v267 = vsel %vm263, %v262, %v256
    %vm268 = vmand %vm177, %vm189
    %vm269 = vmand %vm178, %vm190
    %vm270 = vmand %vm179, %vm191
    %vm271 = vmand %vm180, %vm192
    %v272 = vsel %vm268, 1, 0
    %v273 = vsel %vm269, 1, 0
    %v274 = vsel %vm270, 1, 0
    %v275 = vsel %vm271, 1, 0
    %vm276 = vcmp.eq.s32.totalorder %v272, 1
    %vm277 = vcmp.eq.s32.totalorder %v273, 1
    %vm278 = vcmp.eq.s32.totalorder %v274, 1
    %vm279 = vcmp.eq.s32.totalorder %v275, 1
    %v280 = vsel %vm276, %v267, 0.0
    %v281 = vsel %vm277, %v266, 0.0
    %v282 = vsel %vm278, %v265, 0.0
    %v283 = vsel %vm279, %v264, 0.0
    %284 = vst [vmem:[#allocation2 + $0x40] sm:$0xff] %v280
    %285 = vst [vmem:[#allocation2 + $0x48] sm:$0xff] %v281
    %286 = vst [vmem:[#allocation2 + $0x50] sm:$0xff] %v282
    %287 = vst [vmem:[#allocation2 + $0x58] sm:$0xff] %v283
    %288 = vrot.lane.b32.xlu0 %v72, 1
    %v289 = vpop.permute.xlu0 %288
    %290 = vrot.lane.b32.xlu0 %v73, 1
    %v291 = vpop.permute.xlu0 %290
    %292 = vrot.lane.b32.xlu0 %v74, 1
    %v293 = vpop.permute.xlu0 %292
    %294 = vrot.lane.b32.xlu0 %v75, 1
    %v295 = vpop.permute.xlu0 %294
    %vm296 = vcmp.lt.s32.totalorder %v77, 1
    %v297 = vsel %vm296, %v293, %v295
    %v298 = vsel %vm296, %v291, %v293
    %v299 = vsel %vm296, %v289, %v291
    %v300 = vsel %vm296, %v295, %v289
    %v301 = vsel %vm185, 1, 0
    %v302 = vsel %vm186, 1, 0
    %v303 = vsel %vm187, 1, 0
    %v304 = vsel %vm188, 1, 0
    %vm305 = vcmp.eq.s32.totalorder %v301, 1
    %vm306 = vcmp.eq.s32.totalorder %v302, 1
    %vm307 = vcmp.eq.s32.totalorder %v303, 1
    %vm308 = vcmp.eq.s32.totalorder %v304, 1
    %v309 = vsel %vm305, %v300, 0.0
    %v310 = vsel %vm306, %v299, 0.0
    %v311 = vsel %vm307, %v298, 0.0
    %v312 = vsel %vm308, %v297, 0.0
    %313 = vst [vmem:[#allocation2 + $0x60] sm:$0xff] %v309
    %314 = vst [vmem:[#allocation2 + $0x68] sm:$0xff] %v310
    %315 = vst [vmem:[#allocation2 + $0x70] sm:$0xff] %v311
    %316 = vst [vmem:[#allocation2 + $0x78] sm:$0xff] %v312
    %317 = vst [vmem:[#allocation2 + $0x80] sm:$0xff] %v72
    %318 = vst [vmem:[#allocation2 + $0x88] sm:$0xff] %v73
    %319 = vst [vmem:[#allocation2 + $0x90] sm:$0xff] %v74
    %320 = vst [vmem:[#allocation2 + $0x98] sm:$0xff] %v75
    %321 = vrot.lane.b32.xlu0 %v72, 127
    %v322 = vpop.permute.xlu0 %321
    %323 = vrot.lane.b32.xlu0 %v73, 127
    %v324 = vpop.permute.xlu0 %323
    %325 = vrot.lane.b32.xlu0 %v74, 127
    %v326 = vpop.permute.xlu0 %325
    %327 = vrot.lane.b32.xlu0 %v75, 127
    %v328 = vpop.permute.xlu0 %327
    %vm329 = vcmp.lt.s32.totalorder %v77, 127
    %v330 = vsel %vm329, %v326, %v328
    %v331 = vsel %vm329, %v324, %v326
    %v332 = vsel %vm329, %v322, %v324
    %v333 = vsel %vm329, %v328, %v322
    %v334 = vsel %vm189, 1, 0
    %v335 = vsel %vm190, 1, 0
    %v336 = vsel %vm191, 1, 0
    %v337 = vsel %vm192, 1, 0
    %vm338 = vcmp.eq.s32.totalorder %v334, 1
    %vm339 = vcmp.eq.s32.totalorder %v335, 1
    %vm340 = vcmp.eq.s32.totalorder %v336, 1
    %vm341 = vcmp.eq.s32.totalorder %v337, 1
    %v342 = vsel %vm338, %v332, 0.0
    %v343 = vsel %vm339, %v331, 0.0
    %v344 = vsel %vm340, %v330, 0.0
    %v345 = vsel %vm341, %v333, 0.0
    %346 = vst [vmem:[#allocation2 + $0xa0] sm:$0xff] %v342
    %347 = vst [vmem:[#allocation2 + $0xa8] sm:$0xff] %v343
    %348 = vst [vmem:[#allocation2 + $0xb0] sm:$0xff] %v344
    %349 = vst [vmem:[#allocation2 + $0xb8] sm:$0xff] %v345
    %350 = vrot.lane.b32.xlu0 %v72, 113
    %v351 = vpop.permute.xlu0 %350
    %352 = vrot.lane.b32.xlu0 %v73, 113
    %v353 = vpop.permute.xlu0 %352
    %354 = vrot.lane.b32.xlu0 %v74, 113
    %v355 = vpop.permute.xlu0 %354
    %356 = vrot.lane.b32.xlu0 %v75, 113
    %v357 = vpop.permute.xlu0 %356
    %vm358 = vcmp.lt.s32.totalorder %v77, 113
    %v359 = vsel %vm358, %v355, %v357
    %v360 = vsel %vm358, %v353, %v355
    %v361 = vsel %vm358, %v351, %v353
    %v362 = vsel %vm358, %v357, %v351
    %vm363 = vmand %vm181, %vm185
    %vm364 = vmand %vm182, %vm186
    %vm365 = vmand %vm183, %vm187
    %vm366 = vmand %vm184, %vm188
    %v367 = vsel %vm363, 1, 0
    %v368 = vsel %vm364, 1, 0
    %v369 = vsel %vm365, 1, 0
    %v370 = vsel %vm366, 1, 0
    %vm371 = vcmp.eq.s32.totalorder %v367, 1
    %vm372 = vcmp.eq.s32.totalorder %v368, 1
    %vm373 = vcmp.eq.s32.totalorder %v369, 1
    %vm374 = vcmp.eq.s32.totalorder %v370, 1
    %v375 = vsel %vm371, %v361, 0.0
    %v376 = vsel %vm372, %v360, 0.0
    %v377 = vsel %vm373, %v359, 0.0
    %v378 = vsel %vm374, %v362, 0.0
    %379 = vst [vmem:[#allocation2 + $0xc0] sm:$0xff] %v375
    %380 = vst [vmem:[#allocation2 + $0xc8] sm:$0xff] %v376
    %381 = vst [vmem:[#allocation2 + $0xd0] sm:$0xff] %v377
    %382 = vst [vmem:[#allocation2 + $0xd8] sm:$0xff] %v378
    %383 = vrot.lane.b32.xlu0 %v72, 112
    %v384 = vpop.permute.xlu0 %383
    %385 = vrot.lane.b32.xlu0 %v73, 112
    %v386 = vpop.permute.xlu0 %385
    %387 = vrot.lane.b32.xlu0 %v74, 112
    %v388 = vpop.permute.xlu0 %387
    %389 = vrot.lane.b32.xlu0 %v75, 112
    %v390 = vpop.permute.xlu0 %389
    %vm391 = vcmp.lt.s32.totalorder %v77, 112
    %v392 = vsel %vm391, %v388, %v390
    %v393 = vsel %vm391, %v386, %v388
    %v394 = vsel %vm391, %v384, %v386
    %v395 = vsel %vm391, %v390, %v384
    %v396 = vsel %vm181, 1, 0
    %v397 = vsel %vm182, 1, 0
    %v398 = vsel %vm183, 1, 0
    %v399 = vsel %vm184, 1, 0
    %vm400 = vcmp.eq.s32.totalorder %v396, 1
    %vm401 = vcmp.eq.s32.totalorder %v397, 1
    %vm402 = vcmp.eq.s32.totalorder %v398, 1
    %vm403 = vcmp.eq.s32.totalorder %v399, 1
    %v404 = vsel %vm400, %v394, 0.0
    %v405 = vsel %vm401, %v393, 0.0
    %v406 = vsel %vm402, %v392, 0.0
    %v407 = vsel %vm403, %v395, 0.0
    %408 = vst [vmem:[#allocation2 + $0xe0] sm:$0xff] %v404
    %409 = vst [vmem:[#allocation2 + $0xe8] sm:$0xff] %v405
    %410 = vst [vmem:[#allocation2 + $0xf0] sm:$0xff] %v406
    %411 = vst [vmem:[#allocation2 + $0xf8] sm:$0xff] %v407
    %412 = vrot.lane.b32.xlu0 %v72, 111
    %v413 = vpop.permute.xlu0 %412
    %414 = vrot.lane.b32.xlu0 %v73, 111
    %v415 = vpop.permute.xlu0 %414
    %416 = vrot.lane.b32.xlu0 %v74, 111
    %v417 = vpop.permute.xlu0 %416
    %418 = vrot.lane.b32.xlu0 %v75, 111
    %v419 = vpop.permute.xlu0 %418
    %vm420 = vcmp.lt.s32.totalorder %v77, 111
    %v421 = vsel %vm420, %v417, %v419
    %v422 = vsel %vm420, %v415, %v417
    %v423 = vsel %vm420, %v413, %v415
    %v424 = vsel %vm420, %v419, %v413
    %vm425 = vmand %vm181, %vm189
    %vm426 = vmand %vm182, %vm190
    %vm427 = vmand %vm183, %vm191
    %vm428 = vmand %vm184, %vm192
    %v429 = vsel %vm425, 1, 0
    %v430 = vsel %vm426, 1, 0
    %v431 = vsel %vm427, 1, 0
    %v432 = vsel %vm428, 1, 0
    %vm433 = vcmp.eq.s32.totalorder %v429, 1
    %vm434 = vcmp.eq.s32.totalorder %v430, 1
    %vm435 = vcmp.eq.s32.totalorder %v431, 1
    %vm436 = vcmp.eq.s32.totalorder %v432, 1
    %v437 = vsel %vm433, %v423, 0.0
    %v438 = vsel %vm434, %v422, 0.0
    %v439 = vsel %vm435, %v421, 0.0
    %v440 = vsel %vm436, %v424, 0.0
    %441 = vst [vmem:[#allocation2 + $0x100] sm:$0xff] %v437
    %442 = vst [vmem:[#allocation2 + $0x108] sm:$0xff] %v438
    %443 = vst [vmem:[#allocation2 + $0x110] sm:$0xff] %v439
    %444 = vst [vmem:[#allocation2 + $0x118] sm:$0xff] %v440
    %445 = vst [vmem:[#allocation2 + $0x120] sm:$0xff] 1.0
    %446 = vst [vmem:[#allocation2 + $0x128] sm:$0xff] 1.0
    %447 = vst [vmem:[#allocation2 + $0x130] sm:$0xff] 1.0
    %448 = vst [vmem:[#allocation2 + $0x138] sm:$0xff] 1.0
    %v449 = vld [vmem:[#allocation9] sm:$0xff]
    %v450 = vld [vmem:[#allocation9 + $0x8] sm:$0xff]
    %v451 = vld [vmem:[#allocation2] sm:$0xff]
    %v452 = vld [vmem:[#allocation2 + $0x8] sm:$0xff]
    %v453 = vld [vmem:[#allocation2 + $0x10] sm:$0xff]
    %v454 = vld [vmem:[#allocation2 + $0x18] sm:$0xff]
    %v455 = vld [vmem:[#allocation2 + $0x20] sm:$0xff]
    %v456 = vld [vmem:[#allocation2 + $0x28] sm:$0xff]
    %v457 = vld [vmem:[#allocation2 + $0x30] sm:$0xff]
    %v458 = vld [vmem:[#allocation2 + $0x38] sm:$0xff]
    %v459 = vld [vmem:[#allocation2 + $0x40] sm:$0xff]
    %v460 = vld [vmem:[#allocation2 + $0x48] sm:$0xff]
    %v461 = vld [vmem:[#allocation2 + $0x50] sm:$0xff]
    %v462 = vld [vmem:[#allocation2 + $0x58] sm:$0xff]
    %v463 = vld [vmem:[#allocation2 + $0x60] sm:$0xff]
    %v464 = vld [vmem:[#allocation2 + $0x68] sm:$0xff]
    %v465 = vld [vmem:[#allocation2 + $0x70] sm:$0xff]
    %v466 = vld [vmem:[#allocation2 + $0x78] sm:$0xff]
    %v467 = vld [vmem:[#allocation2 + $0x80] sm:$0xff]
    %v468 = vld [vmem:[#allocation2 + $0x88] sm:$0xff]
    %v469 = vld [vmem:[#allocation2 + $0x90] sm:$0xff]
    %v470 = vld [vmem:[#allocation2 + $0x98] sm:$0xff]
    %v471 = vld [vmem:[#allocation2 + $0xa0] sm:$0xff]
    %v472 = vld [vmem:[#allocation2 + $0xa8] sm:$0xff]
    %v473 = vld [vmem:[#allocation2 + $0xb0] sm:$0xff]
    %v474 = vld [vmem:[#allocation2 + $0xb8] sm:$0xff]
    %v475 = vld [vmem:[#allocation2 + $0xc0] sm:$0xff]
    %v476 = vld [vmem:[#allocation2 + $0xc8] sm:$0xff]
    %v477 = vld [vmem:[#allocation2 + $0xd0] sm:$0xff]
    %v478 = vld [vmem:[#allocation2 + $0xd8] sm:$0xff]
    %v479 = vld [vmem:[#allocation2 + $0xe0] sm:$0xff]
    %v480 = vld [vmem:[#allocation2 + $0xe8] sm:$0xff]
    %v481 = vld [vmem:[#allocation2 + $0xf0] sm:$0xff]
    %v482 = vld [vmem:[#allocation2 + $0xf8] sm:$0xff]
    %v483 = vld [vmem:[#allocation2 + $0x100] sm:$0xff]
    %v484 = vld [vmem:[#allocation2 + $0x108] sm:$0xff]
    %v485 = vld [vmem:[#allocation2 + $0x110] sm:$0xff]
    %v486 = vld [vmem:[#allocation2 + $0x118] sm:$0xff]
    %v487 = vld [vmem:[#allocation2 + $0x120] sm:$0xff]
    %v488 = vld [vmem:[#allocation2 + $0x128] sm:$0xff]
    %v489 = vld [vmem:[#allocation2 + $0x130] sm:$0xff]
    %v490 = vld [vmem:[#allocation2 + $0x138] sm:$0xff]
    %vm491 = vcmask 654336
    %v493 = vsel %vm491, %v449, 0
    %v496 = vsel %vm491, %v450, 0
    %498 = vmatprep.subr.mxu0 %v452
    %499 = vmatpush1.msra.mxu0 %v451
    %500 = vmatprep.subr.mxu0 %v456
    %501 = vmatpush1.msra.mxu0 %v455
    %502 = vmatprep.subr.mxu0 %v460
    %503 = vmatpush1.msra.mxu0 %v459
    %504 = vmatprep.subr.mxu0 %v464
    %505 = vmatpush1.msra.mxu0 %v463
    %506 = vmatprep.subr.mxu0 %v468
    %507 = vmatpush1.msra.mxu0 %v467
    %508 = vmatprep.subr.mxu0 %v472
    %509 = vmatpush1.msra.mxu0 %v471
    %510 = vmatprep.subr.mxu0 %v476
    %511 = vmatpush1.msra.mxu0 %v475
    %512 = vmatprep.subr.mxu0 %v480
    %513 = vmatpush1.msra.mxu0 %v479
    %514 = vmatprep.subr.mxu0 %v484
    %515 = vmatpush1.msra.mxu0 %v483
    %516 = vmatprep.subr.mxu0 %v488
    %517 = vmatpush1.msra.mxu0 %v487
    %518 = vmatprep.subr.mxu0 0.0
    %519 = vmatpush1.msra.mxu0 0.0
    %520 = vmatprep.subr.mxu0 0.0
    %521 = vmatpush1.msra.mxu0 0.0
    %522 = vmatprep.subr.mxu0 0.0
    %523 = vmatpush1.msra.mxu0 0.0
    %524 = vmatprep.subr.mxu0 0.0
    %525 = vmatpush1.msra.mxu0 0.0
    %526 = vmatprep.subr.mxu0 0.0
    %527 = vmatpush1.msra.mxu0 0.0
    %528 = vmatprep.subr.mxu0 0.0
    %529 = vmatpush1.msra.mxu0 0.0
    %530 = vmatprep.subr.mxu0 0.0
    %531 = vmatpush1.msra.mxu0 0.0
    %532 = vmatprep.subr.mxu0 0.0
    %533 = vmatpush1.msra.mxu0 0.0
    %534 = vmatprep.subr.mxu0 0.0
    %535 = vmatpush1.msra.mxu0 0.0
    %536 = vmatprep.subr.mxu0 0.0
    %537 = vmatpush1.msra.mxu0 0.0
    %538 = vmatprep.subr.mxu0 0.0
    %539 = vmatpush1.msra.mxu0 0.0
    %540 = vmatprep.subr.mxu0 0.0
    %541 = vmatpush1.msra.mxu0 0.0
    %542 = vmatprep.subr.mxu0 0.0
    %543 = vmatpush1.msra.mxu0 0.0
    %544 = vmatprep.subr.mxu0 0.0
    %545 = vmatpush1.msra.mxu0 0.0
    %546 = vmatprep.subr.mxu0 0.0
    %547 = vmatpush1.msra.mxu0 0.0
    %548 = vmatprep.subr.mxu0 0.0
    %549 = vmatpush1.msra.mxu0 0.0
    %550 = vmatprep.subr.mxu0 0.0
    %551 = vmatpush1.msra.mxu0 0.0
    %552 = vmatprep.subr.mxu0 0.0
    %553 = vmatpush1.msra.mxu0 0.0
    %554 = vmatprep.subr.mxu0 0.0
    %555 = vmatpush1.msra.mxu0 0.0
    %556 = vmatprep.subr.mxu0 0.0
    %557 = vmatpush1.msra.mxu0 0.0
    %558 = vmatprep.subr.mxu0 0.0
    %559 = vmatpush1.msra.mxu0 0.0
    %560 = vmatprep.subr.mxu0 0.0
    %561 = vmatpush1.msra.mxu0 0.0
    %562 = vmatprep.mubr.f32.mxu0 0.0
    %563 = vmatmul.mubr.f32.gmra.mrb[0].mxu0 %v493
    %v564 = vpop.f32.mrb[0].mxu0
    %v565 = vadd.f32 0.0, %v564
    %v566 = vpop.f32.mrb[0].mxu0
    %v567 = vadd.f32 0.0, %v566
    %568 = vmatprep.mubr.f32.mxu0 0.0
    %569 = vmatmul.mubr.f32.gmra.mrb[0].mxu0 %v496
    %v570 = vpop.f32.mrb[0].mxu0
    %v571 = vadd.f32 0.0, %v570
    %v572 = vpop.f32.mrb[0].mxu0
    %v573 = vadd.f32 0.0, %v572
    %574 = vdwg.mxu0
    %575 = vmatprep.subr.mxu0 %v454
    %576 = vmatpush1.msra.mxu0 %v453
    %577 = vmatprep.subr.mxu0 %v458
    %578 = vmatpush1.msra.mxu0 %v457
    %579 = vmatprep.subr.mxu0 %v462
    %580 = vmatpush1.msra.mxu0 %v461
    %581 = vmatprep.subr.mxu0 %v466
    %582 = vmatpush1.msra.mxu0 %v465
    %583 = vmatprep.subr.mxu0 %v470
    %584 = vmatpush1.msra.mxu0 %v469
    %585 = vmatprep.subr.mxu0 %v474
    %586 = vmatpush1.msra.mxu0 %v473
    %587 = vmatprep.subr.mxu0 %v478
    %588 = vmatpush1.msra.mxu0 %v477
    %589 = vmatprep.subr.mxu0 %v482
    %590 = vmatpush1.msra.mxu0 %v481
    %591 = vmatprep.subr.mxu0 %v486
    %592 = vmatpush1.msra.mxu0 %v485
    %593 = vmatprep.subr.mxu0 %v490
    %594 = vmatpush1.msra.mxu0 %v489
    %595 = vmatprep.subr.mxu0 0.0
    %596 = vmatpush1.msra.mxu0 0.0
    %597 = vmatprep.subr.mxu0 0.0
    %598 = vmatpush1.msra.mxu0 0.0
    %599 = vmatprep.subr.mxu0 0.0
    %600 = vmatpush1.msra.mxu0 0.0
    %601 = vmatprep.subr.mxu0 0.0
    %602 = vmatpush1.msra.mxu0 0.0
    %603 = vmatprep.subr.mxu0 0.0
    %604 = vmatpush1.msra.mxu0 0.0
    %605 = vmatprep.subr.mxu0 0.0
    %606 = vmatpush1.msra.mxu0 0.0
    %607 = vmatprep.subr.mxu0 0.0
    %608 = vmatpush1.msra.mxu0 0.0
    %609 = vmatprep.subr.mxu0 0.0
    %610 = vmatpush1.msra.mxu0 0.0
    %611 = vmatprep.subr.mxu0 0.0
    %612 = vmatpush1.msra.mxu0 0.0
    %613 = vmatprep.subr.mxu0 0.0
    %614 = vmatpush1.msra.mxu0 0.0
    %615 = vmatprep.subr.mxu0 0.0
    %616 = vmatpush1.msra.mxu0 0.0
    %617 = vmatprep.subr.mxu0 0.0
    %618 = vmatpush1.msra.mxu0 0.0
    %619 = vmatprep.subr.mxu0 0.0
    %620 = vmatpush1.msra.mxu0 0.0
    %621 = vmatprep.subr.mxu0 0.0
    %622 = vmatpush1.msra.mxu0 0.0
    %623 = vmatprep.subr.mxu0 0.0
    %624 = vmatpush1.msra.mxu0 0.0
    %625 = vmatprep.subr.mxu0 0.0
    %626 = vmatpush1.msra.mxu0 0.0
    %627 = vmatprep.subr.mxu0 0.0
    %628 = vmatpush1.msra.mxu0 0.0
    %629 = vmatprep.subr.mxu0 0.0
    %630 = vmatpush1.msra.mxu0 0.0
    %631 = vmatprep.subr.mxu0 0.0
    %632 = vmatpush1.msra.mxu0 0.0
    %633 = vmatprep.subr.mxu0 0.0
    %634 = vmatpush1.msra.mxu0 0.0
    %635 = vmatprep.subr.mxu0 0.0
    %636 = vmatpush1.msra.mxu0 0.0
    %637 = vmatprep.subr.mxu0 0.0
    %638 = vmatpush1.msra.mxu0 0.0
    %639 = vmatprep.mubr.f32.mxu0 0.0
    %640 = vmatmul.mubr.f32.gmra.mrb[0].mxu0 %v493
    %v641 = vpop.f32.mrb[0].mxu0
    %v642 = vadd.f32 0.0, %v641
    %v643 = vpop.f32.mrb[0].mxu0
    %v644 = vadd.f32 0.0, %v643
    %645 = vmatprep.mubr.f32.mxu0 0.0
    %646 = vmatmul.mubr.f32.gmra.mrb[0].mxu0 %v496
    %v647 = vpop.f32.mrb[0].mxu0
    %v648 = vadd.f32 0.0, %v647
    %v649 = vpop.f32.mrb[0].mxu0
    %v650 = vadd.f32 0.0, %v649
    %651 = vdwg.mxu0
    %v652 = vmax.f32 %v565, 0.0
    %v653 = vmax.f32 %v567, 0.0
    %v654 = vmax.f32 %v642, 0.0
    %v655 = vmax.f32 %v644, 0.0
    %v656 = vmax.f32 %v571, 0.0
    %v657 = vmax.f32 %v573, 0.0
    %v658 = vmax.f32 %v648, 0.0
    %v659 = vmax.f32 %v650, 0.0
    %660 = vrot.lane.b32.xlu0 %v652, 17
    %v661 = vpop.permute.xlu0 %660
    %662 = vrot.lane.b32.xlu0 %v656, 17
    %v663 = vpop.permute.xlu0 %662
    %664 = vrot.lane.b32.xlu0 %v653, 17
    %v665 = vpop.permute.xlu0 %664
    %666 = vrot.lane.b32.xlu0 %v657, 17
    %v667 = vpop.permute.xlu0 %666
    %668 = vrot.lane.b32.xlu0 %v654, 17
    %v669 = vpop.permute.xlu0 %668
    %670 = vrot.lane.b32.xlu0 %v658, 17
    %v671 = vpop.permute.xlu0 %670
    %672 = vrot.lane.b32.xlu0 %v655, 17
    %v673 = vpop.permute.xlu0 %672
    %674 = vrot.lane.b32.xlu0 %v659, 17
    %v675 = vpop.permute.xlu0 %674
    %v676 = vsel %vm201, %v669, %v673
    %v677 = vsel %vm201, %v671, %v675
    %v678 = vsel %vm201, %v665, %v669
    %v679 = vsel %vm201, %v667, %v671
    %v680 = vsel %vm201, %v661, %v665
    %v681 = vsel %vm201, %v663, %v667
    %v682 = vsel %vm201, %v673, %v661
    %v683 = vsel %vm201, %v675, %v663
    %v684 = vsel %vm214, %v682, 0.0
    %v685 = vsel %vm215, %v680, 0.0
    %v686 = vsel %vm216, %v678, 0.0
    %v687 = vsel %vm217, %v676, 0.0
    %v688 = vsel %vm214, %v683, 0.0
    %v689 = vsel %vm215, %v681, 0.0
    %v690 = vsel %vm216, %v679, 0.0
    %v691 = vsel %vm217, %v677, 0.0
    %692 = vst [vmem:[#allocation3] sm:$0xff] %v684
    %693 = vst [vmem:[#allocation3 + $0x8] sm:$0xff] %v685
    %694 = vst [vmem:[#allocation3 + $0x10] sm:$0xff] %v686
    %695 = vst [vmem:[#allocation3 + $0x18] sm:$0xff] %v687
    %696 = vst [vmem:[#allocation3 + $0x20] sm:$0xff] %v688
    %697 = vst [vmem:[#allocation3 + $0x28] sm:$0xff] %v689
    %698 = vst [vmem:[#allocation3 + $0x30] sm:$0xff] %v690
    %699 = vst [vmem:[#allocation3 + $0x38] sm:$0xff] %v691
    %700 = vrot.lane.b32.xlu0 %v652, 16
    %v701 = vpop.permute.xlu0 %700
    %702 = vrot.lane.b32.xlu0 %v656, 16
    %v703 = vpop.permute.xlu0 %702
    %704 = vrot.lane.b32.xlu0 %v653, 16
    %v705 = vpop.permute.xlu0 %704
    %706 = vrot.lane.b32.xlu0 %v657, 16
    %v707 = vpop.permute.xlu0 %706
    %708 = vrot.lane.b32.xlu0 %v654, 16
    %v709 = vpop.permute.xlu0 %708
    %710 = vrot.lane.b32.xlu0 %v658, 16
    %v711 = vpop.permute.xlu0 %710
    %712 = vrot.lane.b32.xlu0 %v655, 16
    %v713 = vpop.permute.xlu0 %712
    %714 = vrot.lane.b32.xlu0 %v659, 16
    %v715 = vpop.permute.xlu0 %714
    %v716 = vsel %vm234, %v709, %v713
    %v717 = vsel %vm234, %v711, %v715
    %v718 = vsel %vm234, %v705, %v709
    %v719 = vsel %vm234, %v707, %v711
    %v720 = vsel %vm234, %v701, %v705
    %v721 = vsel %vm234, %v703, %v707
    %v722 = vsel %vm234, %v713, %v701
    %v723 = vsel %vm234, %v715, %v703
    %v724 = vsel %vm243, %v722, 0.0
    %v725 = vsel %vm244, %v720, 0.0
    %v726 = vsel %vm245, %v718, 0.0
    %v727 = vsel %vm246, %v716, 0.0
    %v728 = vsel %vm243, %v723, 0.0
    %v729 = vsel %vm244, %v721, 0.0
    %v730 = vsel %vm245, %v719, 0.0
    %v731 = vsel %vm246, %v717, 0.0
    %732 = vst [vmem:[#allocation3 + $0x40] sm:$0xff] %v724
    %733 = vst [vmem:[#allocation3 + $0x48] sm:$0xff] %v725
    %734 = vst [vmem:[#allocation3 + $0x50] sm:$0xff] %v726
    %735 = vst [vmem:[#allocation3 + $0x58] sm:$0xff] %v727
    %736 = vst [vmem:[#allocation3 + $0x60] sm:$0xff] %v728
    %737 = vst [vmem:[#allocation3 + $0x68] sm:$0xff] %v729
    %738 = vst [vmem:[#allocation3 + $0x70] sm:$0xff] %v730
    %739 = vst [vmem:[#allocation3 + $0x78] sm:$0xff] %v731
    %740 = vrot.lane.b32.xlu0 %v652, 15
    %v741 = vpop.permute.xlu0 %740
    %742 = vrot.lane.b32.xlu0 %v656, 15
    %v743 = vpop.permute.xlu0 %742
    %744 = vrot.lane.b32.xlu0 %v653, 15
    %v745 = vpop.permute.xlu0 %744
    %746 = vrot.lane.b32.xlu0 %v657, 15
    %v747 = vpop.permute.xlu0 %746
    %748 = vrot.lane.b32.xlu0 %v654, 15
    %v749 = vpop.permute.xlu0 %748
    %750 = vrot.lane.b32.xlu0 %v658, 15
    %v751 = vpop.permute.xlu0 %750
    %752 = vrot.lane.b32.xlu0 %v655, 15
    %v753 = vpop.permute.xlu0 %752
    %754 = vrot.lane.b32.xlu0 %v659, 15
    %v755 = vpop.permute.xlu0 %754
    %v756 = vsel %vm263, %v749, %v753
    %v757 = vsel %vm263, %v751, %v755
    %v758 = vsel %vm263, %v745, %v749
    %v759 = vsel %vm263, %v747, %v751
    %v760 = vsel %vm263, %v741, %v745
    %v761 = vsel %vm263, %v743, %v747
    %v762 = vsel %vm263, %v753, %v741
    %v763 = vsel %vm263, %v755, %v743
    %v764 = vsel %vm276, %v762, 0.0
    %v765 = vsel %vm277, %v760, 0.0
    %v766 = vsel %vm278, %v758, 0.0
    %v767 = vsel %vm279, %v756, 0.0
    %v768 = vsel %vm276, %v763, 0.0
    %v769 = vsel %vm277, %v761, 0.0
    %v770 = vsel %vm278, %v759, 0.0
    %v771 = vsel %vm279, %v757, 0.0
    %772 = vst [vmem:[#allocation3 + $0x80] sm:$0xff] %v764
    %773 = vst [vmem:[#allocation3 + $0x88] sm:$0xff] %v765
    %774 = vst [vmem:[#allocation3 + $0x90] sm:$0xff] %v766
    %775 = vst [vmem:[#allocation3 + $0x98] sm:$0xff] %v767
    %776 = vst [vmem:[#allocation3 + $0xa0] sm:$0xff] %v768
    %777 = vst [vmem:[#allocation3 + $0xa8] sm:$0xff] %v769
    %778 = vst [vmem:[#allocation3 + $0xb0] sm:$0xff] %v770
    %779 = vst [vmem:[#allocation3 + $0xb8] sm:$0xff] %v771
    %780 = vrot.lane.b32.xlu0 %v652, 1
    %v781 = vpop.permute.xlu0 %780
    %782 = vrot.lane.b32.xlu0 %v656, 1
    %v783 = vpop.permute.xlu0 %782
    %784 = vrot.lane.b32.xlu0 %v653, 1
    %v785 = vpop.permute.xlu0 %784
    %786 = vrot.lane.b32.xlu0 %v657, 1
    %v787 = vpop.permute.xlu0 %786
    %788 = vrot.lane.b32.xlu0 %v654, 1
    %v789 = vpop.permute.xlu0 %788
    %790 = vrot.lane.b32.xlu0 %v658, 1
    %v791 = vpop.permute.xlu0 %790
    %792 = vrot.lane.b32.xlu0 %v655, 1
    %v793 = vpop.permute.xlu0 %792
    %794 = vrot.lane.b32.xlu0 %v659, 1
    %v795 = vpop.permute.xlu0 %794
    %v796 = vsel %vm296, %v789, %v793
    %v797 = vsel %vm296, %v791, %v795
    %v798 = vsel %vm296, %v785, %v789
    %v799 = vsel %vm296, %v787, %v791
    %v800 = vsel %vm296, %v781, %v785
    %v801 = vsel %vm296, %v783, %v787
    %v802 = vsel %vm296, %v793, %v781
    %v803 = vsel %vm296, %v795, %v783
    %v804 = vsel %vm305, %v802, 0.0
    %v805 = vsel %vm306, %v800, 0.0
    %v806 = vsel %vm307, %v798, 0.0
    %v807 = vsel %vm308, %v796, 0.0
    %v808 = vsel %vm305, %v803, 0.0
    %v809 = vsel %vm306, %v801, 0.0
    %v810 = vsel %vm307, %v799, 0.0
    %v811 = vsel %vm308, %v797, 0.0
    %812 = vst [vmem:[#allocation3 + $0xc0] sm:$0xff] %v804
    %813 = vst [vmem:[#allocation3 + $0xc8] sm:$0xff] %v805
    %814 = vst [vmem:[#allocation3 + $0xd0] sm:$0xff] %v806
    %815 = vst [vmem:[#allocation3 + $0xd8] sm:$0xff] %v807
    %816 = vst [vmem:[#allocation3 + $0xe0] sm:$0xff] %v808
    %817 = vst [vmem:[#allocation3 + $0xe8] sm:$0xff] %v809
    %818 = vst [vmem:[#allocation3 + $0xf0] sm:$0xff] %v810
    %819 = vst [vmem:[#allocation3 + $0xf8] sm:$0xff] %v811
    %820 = vst [vmem:[#allocation3 + $0x100] sm:$0xff] %v652
    %821 = vst [vmem:[#allocation3 + $0x108] sm:$0xff] %v653
    %822 = vst [vmem:[#allocation3 + $0x110] sm:$0xff] %v654
    %823 = vst [vmem:[#allocation3 + $0x118] sm:$0xff] %v655
    %824 = vst [vmem:[#allocation3 + $0x120] sm:$0xff] %v656
    %825 = vst [vmem:[#allocation3 + $0x128] sm:$0xff] %v657
    %826 = vst [vmem:[#allocation3 + $0x130] sm:$0xff] %v658
    %827 = vst [vmem:[#allocation3 + $0x138] sm:$0xff] %v659
    %828 = vrot.lane.b32.xlu0 %v652, 127
    %v829 = vpop.permute.xlu0 %828
    %830 = vrot.lane.b32.xlu0 %v656, 127
    %v831 = vpop.permute.xlu0 %830
    %832 = vrot.lane.b32.xlu0 %v653, 127
    %v833 = vpop.permute.xlu0 %832
    %834 = vrot.lane.b32.xlu0 %v657, 127
    %v835 = vpop.permute.xlu0 %834
    %836 = vrot.lane.b32.xlu0 %v654, 127
    %v837 = vpop.permute.xlu0 %836
    %838 = vrot.lane.b32.xlu0 %v658, 127
    %v839 = vpop.permute.xlu0 %838
    %840 = vrot.lane.b32.xlu0 %v655, 127
    %v841 = vpop.permute.xlu0 %840
    %842 = vrot.lane.b32.xlu0 %v659, 127
    %v843 = vpop.permute.xlu0 %842
    %v844 = vsel %vm329, %v837, %v841
    %v845 = vsel %vm329, %v839, %v843
    %v846 = vsel %vm329, %v833, %v837
    %v847 = vsel %vm329, %v835, %v839
    %v848 = vsel %vm329, %v829, %v833
    %v849 = vsel %vm329, %v831, %v835
    %v850 = vsel %vm329, %v841, %v829
    %v851 = vsel %vm329, %v843, %v831
    %v852 = vsel %vm338, %v848, 0.0
    %v853 = vsel %vm339, %v846, 0.0
    %v854 = vsel %vm340, %v844, 0.0
    %v855 = vsel %vm341, %v850, 0.0
    %v856 = vsel %vm338, %v849, 0.0
    %v857 = vsel %vm339, %v847, 0.0
    %v858 = vsel %vm340, %v845, 0.0
    %v859 = vsel %vm341, %v851, 0.0
    %860 = vst [vmem:[#allocation3 + $0x140] sm:$0xff] %v852
    %861 = vst [vmem:[#allocation3 + $0x148] sm:$0xff] %v853
    %862 = vst [vmem:[#allocation3 + $0x150] sm:$0xff] %v854
    %863 = vst [vmem:[#allocation3 + $0x158] sm:$0xff] %v855
    %864 = vst [vmem:[#allocation3 + $0x160] sm:$0xff] %v856
    %865 = vst [vmem:[#allocation3 + $0x168] sm:$0xff] %v857
    %866 = vst [vmem:[#allocation3 + $0x170] sm:$0xff] %v858
    %867 = vst [vmem:[#allocation3 + $0x178] sm:$0xff] %v859
    %868 = vrot.lane.b32.xlu0 %v652, 113
    %v869 = vpop.permute.xlu0 %868
    %870 = vrot.lane.b32.xlu0 %v656, 113
    %v871 = vpop.permute.xlu0 %870
    %872 = vrot.lane.b32.xlu0 %v653, 113
    %v873 = vpop.permute.xlu0 %872
    %874 = vrot.lane.b32.xlu0 %v657, 113
    %v875 = vpop.permute.xlu0 %874
    %876 = vrot.lane.b32.xlu0 %v654, 113
    %v877 = vpop.permute.xlu0 %876
    %878 = vrot.lane.b32.xlu0 %v658, 113
    %v879 = vpop.permute.xlu0 %878
    %880 = vrot.lane.b32.xlu0 %v655, 113
    %v881 = vpop.permute.xlu0 %880
    %882 = vrot.lane.b32.xlu0 %v659, 113
    %v883 = vpop.permute.xlu0 %882
    %v884 = vsel %vm358, %v877, %v881
    %v885 = vsel %vm358, %v879, %v883
    %v886 = vsel %vm358, %v873, %v877
    %v887 = vsel %vm358, %v875, %v879
    %v888 = vsel %vm358, %v869, %v873
    %v889 = vsel %vm358, %v871, %v875
    %v890 = vsel %vm358, %v881, %v869
    %v891 = vsel %vm358, %v883, %v871
    %v892 = vsel %vm371, %v888, 0.0
    %v893 = vsel %vm372, %v886, 0.0
    %v894 = vsel %vm373, %v884, 0.0
    %v895 = vsel %vm374, %v890, 0.0
    %v896 = vsel %vm371, %v889, 0.0
    %v897 = vsel %vm372, %v887, 0.0
    %v898 = vsel %vm373, %v885, 0.0
    %v899 = vsel %vm374, %v891, 0.0
    %900 = vst [vmem:[#allocation3 + $0x180] sm:$0xff] %v892
    %901 = vst [vmem:[#allocation3 + $0x188] sm:$0xff] %v893
    %902 = vst [vmem:[#allocation3 + $0x190] sm:$0xff] %v894
    %903 = vst [vmem:[#allocation3 + $0x198] sm:$0xff] %v895
    %904 = vst [vmem:[#allocation3 + $0x1a0] sm:$0xff] %v896
    %905 = vst [vmem:[#allocation3 + $0x1a8] sm:$0xff] %v897
    %906 = vst [vmem:[#allocation3 + $0x1b0] sm:$0xff] %v898
    %907 = vst [vmem:[#allocation3 + $0x1b8] sm:$0xff] %v899
    %908 = vrot.lane.b32.xlu0 %v652, 112
    %v909 = vpop.permute.xlu0 %908
    %910 = vrot.lane.b32.xlu0 %v656, 112
    %v911 = vpop.permute.xlu0 %910
    %912 = vrot.lane.b32.xlu0 %v653, 112
    %v913 = vpop.permute.xlu0 %912
    %914 = vrot.lane.b32.xlu0 %v657, 112
    %v915 = vpop.permute.xlu0 %914
    %916 = vrot.lane.b32.xlu0 %v654, 112
    %v917 = vpop.permute.xlu0 %916
    %918 = vrot.lane.b32.xlu0 %v658, 112
    %v919 = vpop.permute.xlu0 %918
    %920 = vrot.lane.b32.xlu0 %v655, 112
    %v921 = vpop.permute.xlu0 %920
    %922 = vrot.lane.b32.xlu0 %v659, 112
    %v923 = vpop.permute.xlu0 %922
    %v924 = vsel %vm391, %v917, %v921
    %v925 = vsel %vm391, %v919, %v923
    %v926 = vsel %vm391, %v913, %v917
    %v927 = vsel %vm391, %v915, %v919
    %v928 = vsel %vm391, %v909, %v913
    %v929 = vsel %vm391, %v911, %v915
    %v930 = vsel %vm391, %v921, %v909
    %v931 = vsel %vm391, %v923, %v911
    %v932 = vsel %vm400, %v928, 0.0
    %v933 = vsel %vm401, %v926, 0.0
    %v934 = vsel %vm402, %v924, 0.0
    %v935 = vsel %vm403, %v930, 0.0
    %v936 = vsel %vm400, %v929, 0.0
    %v937 = vsel %vm401, %v927, 0.0
    %v938 = vsel %vm402, %v925, 0.0
    %v939 = vsel %vm403, %v931, 0.0
    %940 = vst [vmem:[#allocation3 + $0x1c0] sm:$0xff] %v932
    %941 = vst [vmem:[#allocation3 + $0x1c8] sm:$0xff] %v933
    %942 = vst [vmem:[#allocation3 + $0x1d0] sm:$0xff] %v934
    %943 = vst [vmem:[#allocation3 + $0x1d8] sm:$0xff] %v935
    %944 = vst [vmem:[#allocation3 + $0x1e0] sm:$0xff] %v936
    %945 = vst [vmem:[#allocation3 + $0x1e8] sm:$0xff] %v937
    %946 = vst [vmem:[#allocation3 + $0x1f0] sm:$0xff] %v938
    %947 = vst [vmem:[#allocation3 + $0x1f8] sm:$0xff] %v939
    %948 = vrot.lane.b32.xlu0 %v652, 111
    %v949 = vpop.permute.xlu0 %948
    %950 = vrot.lane.b32.xlu0 %v656, 111
    %v951 = vpop.permute.xlu0 %950
    %952 = vrot.lane.b32.xlu0 %v653, 111
    %v953 = vpop.permute.xlu0 %952
    %954 = vrot.lane.b32.xlu0 %v657, 111
    %v955 = vpop.permute.xlu0 %954
    %956 = vrot.lane.b32.xlu0 %v654, 111
    %v957 = vpop.permute.xlu0 %956
    %958 = vrot.lane.b32.xlu0 %v658, 111
    %v959 = vpop.permute.xlu0 %958
    %960 = vrot.lane.b32.xlu0 %v655, 111
    %v961 = vpop.permute.xlu0 %960
    %962 = vrot.lane.b32.xlu0 %v659, 111
    %v963 = vpop.permute.xlu0 %962
    %v964 = vsel %vm420, %v957, %v961
    %v965 = vsel %vm420, %v959, %v963
    %v966 = vsel %vm420, %v953, %v957
    %v967 = vsel %vm420, %v955, %v959
    %v968 = vsel %vm420, %v949, %v953
    %v969 = vsel %vm420, %v951, %v955
    %v970 = vsel %vm420, %v961, %v949
    %v971 = vsel %vm420, %v963, %v951
    %v972 = vsel %vm433, %v968, 0.0
    %v973 = vsel %vm434, %v966, 0.0
    %v974 = vsel %vm435, %v964, 0.0
    %v975 = vsel %vm436, %v970, 0.0
    %v976 = vsel %vm433, %v969, 0.0
    %v977 = vsel %vm434, %v967, 0.0
    %v978 = vsel %vm435, %v965, 0.0
    %v979 = vsel %vm436, %v971, 0.0
    %980 = vst [vmem:[#allocation3 + $0x200] sm:$0xff] %v972
    %981 = vst [vmem:[#allocation3 + $0x208] sm:$0xff] %v973
    %982 = vst [vmem:[#allocation3 + $0x210] sm:$0xff] %v974
    %983 = vst [vmem:[#allocation3 + $0x218] sm:$0xff] %v975
    %984 = vst [vmem:[#allocation3 + $0x220] sm:$0xff] %v976
    %985 = vst [vmem:[#allocation3 + $0x228] sm:$0xff] %v977
    %986 = vst [vmem:[#allocation3 + $0x230] sm:$0xff] %v978
    %987 = vst [vmem:[#allocation3 + $0x238] sm:$0xff] %v979
    %988 = vst [vmem:[#allocation3 + $0x240] sm:$0xff] 1.0
    %989 = vst [vmem:[#allocation3 + $0x248] sm:$0xff] 1.0
    %990 = vst [vmem:[#allocation3 + $0x250] sm:$0xff] 1.0
    %991 = vst [vmem:[#allocation3 + $0x258] sm:$0xff] 1.0
    %v992 = vld [vmem:[%s3] sm:$0xff]
    %v993 = vld [vmem:[#allocation3] sm:$0xff]
    %v994 = vld [vmem:[#allocation3 + $0x8] sm:$0xff]
    %v995 = vld [vmem:[#allocation3 + $0x10] sm:$0xff]
    %v996 = vld [vmem:[#allocation3 + $0x18] sm:$0xff]
    %v997 = vld [vmem:[#allocation3 + $0x20] sm:$0xff]
    %v998 = vld [vmem:[#allocation3 + $0x28] sm:$0xff]
    %v999 = vld [vmem:[#allocation3 + $0x30] sm:$0xff]
    %v1000 = vld [vmem:[#allocation3 + $0x38] sm:$0xff]
    %v1001 = vld [vmem:[#allocation3 + $0x40] sm:$0xff]
    %v1002 = vld [vmem:[#allocation3 + $0x48] sm:$0xff]
    %v1003 = vld [vmem:[#allocation3 + $0x50] sm:$0xff]
    %v1004 = vld [vmem:[#allocation3 + $0x58] sm:$0xff]
    %v1005 = vld [vmem:[#allocation3 + $0x60] sm:$0xff]
    %v1006 = vld [vmem:[#allocation3 + $0x68] sm:$0xff]
    %v1007 = vld [vmem:[#allocation3 + $0x70] sm:$0xff]
    %v1008 = vld [vmem:[#allocation3 + $0x78] sm:$0xff]
    %v1009 = vld [vmem:[#allocation3 + $0x80] sm:$0xff]
    %v1010 = vld [vmem:[#allocation3 + $0x88] sm:$0xff]
    %v1011 = vld [vmem:[#allocation3 + $0x90] sm:$0xff]
    %v1012 = vld [vmem:[#allocation3 + $0x98] sm:$0xff]
    %v1013 = vld [vmem:[#allocation3 + $0xa0] sm:$0xff]
    %v1014 = vld [vmem:[#allocation3 + $0xa8] sm:$0xff]
    %v1015 = vld [vmem:[#allocation3 + $0xb0] sm:$0xff]
    %v1016 = vld [vmem:[#allocation3 + $0xb8] sm:$0xff]
    %v1017 = vld [vmem:[#allocation3 + $0xc0] sm:$0xff]
    %v1018 = vld [vmem:[#allocation3 + $0xc8] sm:$0xff]
    %v1019 = vld [vmem:[#allocation3 + $0xd0] sm:$0xff]
    %v1020 = vld [vmem:[#allocation3 + $0xd8] sm:$0xff]
    %v1021 = vld [vmem:[#allocation3 + $0xe0] sm:$0xff]
    %v1022 = vld [vmem:[#allocation3 + $0xe8] sm:$0xff]
    %v1023 = vld [vmem:[#allocation3 + $0xf0] sm:$0xff]
    %v1024 = vld [vmem:[#allocation3 + $0xf8] sm:$0xff]
    %v1025 = vld [vmem:[#allocation3 + $0x100] sm:$0xff]
    %v1026 = vld [vmem:[#allocation3 + $0x108] sm:$0xff]
    %v1027 = vld [vmem:[#allocation3 + $0x110] sm:$0xff]
    %v1028 = vld [vmem:[#allocation3 + $0x118] sm:$0xff]
    %v1029 = vld [vmem:[#allocation3 + $0x120] sm:$0xff]
    %v1030 = vld [vmem:[#allocation3 + $0x128] sm:$0xff]
    %v1031 = vld [vmem:[#allocation3 + $0x130] sm:$0xff]
    %v1032 = vld [vmem:[#allocation3 + $0x138] sm:$0xff]
    %v1033 = vld [vmem:[#allocation3 + $0x140] sm:$0xff]
    %v1034 = vld [vmem:[#allocation3 + $0x148] sm:$0xff]
    %v1035 = vld [vmem:[#allocation3 + $0x150] sm:$0xff]
    %v1036 = vld [vmem:[#allocation3 + $0x158] sm:$0xff]
    %v1037 = vld [vmem:[#allocation3 + $0x160] sm:$0xff]
    %v1038 = vld [vmem:[#allocation3 + $0x168] sm:$0xff]
    %v1039 = vld [vmem:[#allocation3 + $0x170] sm:$0xff]
    %v1040 = vld [vmem:[#allocation3 + $0x178] sm:$0xff]
    %v1041 = vld [vmem:[#allocation3 + $0x180] sm:$0xff]
    %v1042 = vld [vmem:[#allocation3 + $0x188] sm:$0xff]
    %v1043 = vld [vmem:[#allocation3 + $0x190] sm:$0xff]
    %v1044 = vld [vmem:[#allocation3 + $0x198] sm:$0xff]
    %v1045 = vld [vmem:[#allocation3 + $0x1a0] sm:$0xff]
    %v1046 = vld [vmem:[#allocation3 + $0x1a8] sm:$0xff]
    %v1047 = vld [vmem:[#allocation3 + $0x1b0] sm:$0xff]
    %v1048 = vld [vmem:[#allocation3 + $0x1b8] sm:$0xff]
    %v1049 = vld [vmem:[#allocation3 + $0x1c0] sm:$0xff]
    %v1050 = vld [vmem:[#allocation3 + $0x1c8] sm:$0xff]
    %v1051 = vld [vmem:[#allocation3 + $0x1d0] sm:$0xff]
    %v1052 = vld [vmem:[#allocation3 + $0x1d8] sm:$0xff]
    %v1053 = vld [vmem:[#allocation3 + $0x1e0] sm:$0xff]
    %v1054 = vld [vmem:[#allocation3 + $0x1e8] sm:$0xff]
    %v1055 = vld [vmem:[#allocation3 + $0x1f0] sm:$0xff]
    %v1056 = vld [vmem:[#allocation3 + $0x1f8] sm:$0xff]
    %v1057 = vld [vmem:[#allocation3 + $0x200] sm:$0xff]
    %v1058 = vld [vmem:[#allocation3 + $0x208] sm:$0xff]
    %v1059 = vld [vmem:[#allocation3 + $0x210] sm:$0xff]
    %v1060 = vld [vmem:[#allocation3 + $0x218] sm:$0xff]
    %v1061 = vld [vmem:[#allocation3 + $0x220] sm:$0xff]
    %v1062 = vld [vmem:[#allocation3 + $0x228] sm:$0xff]
    %v1063 = vld [vmem:[#allocation3 + $0x230] sm:$0xff]
    %v1064 = vld [vmem:[#allocation3 + $0x238] sm:$0xff]
    %v1065 = vld [vmem:[#allocation3 + $0x240] sm:$0xff]
    %v1066 = vld [vmem:[#allocation3 + $0x248] sm:$0xff]
    %v1067 = vld [vmem:[#allocation3 + $0x250] sm:$0xff]
    %v1068 = vld [vmem:[#allocation3 + $0x258] sm:$0xff]
    %v1070 = vcombine.high %v992, %v992
    %vm1071 = vcmask 195584
    %v1072 = vsel %vm1071, %v1070, 0
    %1074 = vmatprep.subr.mxu0 %v994
    %1075 = vmatpush1.msra.mxu0 %v993
    %1076 = vmatprep.subr.mxu0 %v998
    %1077 = vmatpush1.msra.mxu0 %v997
    %1078 = vmatprep.subr.mxu0 %v1002
    %1079 = vmatpush1.msra.mxu0 %v1001
    %1080 = vmatprep.subr.mxu0 %v1006
    %1081 = vmatpush1.msra.mxu0 %v1005
    %1082 = vmatprep.subr.mxu0 %v1010
    %1083 = vmatpush1.msra.mxu0 %v1009
    %1084 = vmatprep.subr.mxu0 %v1014
    %1085 = vmatpush1.msra.mxu0 %v1013
    %1086 = vmatprep.subr.mxu0 %v1018
    %1087 = vmatpush1.msra.mxu0 %v1017
    %1088 = vmatprep.subr.mxu0 %v1022
    %1089 = vmatpush1.msra.mxu0 %v1021
    %1090 = vmatprep.subr.mxu0 %v1026
    %1091 = vmatpush1.msra.mxu0 %v1025
    %1092 = vmatprep.subr.mxu0 %v1030
    %1093 = vmatpush1.msra.mxu0 %v1029
    %1094 = vmatprep.subr.mxu0 %v1034
    %1095 = vmatpush1.msra.mxu0 %v1033
    %1096 = vmatprep.subr.mxu0 %v1038
    %1097 = vmatpush1.msra.mxu0 %v1037
    %1098 = vmatprep.subr.mxu0 %v1042
    %1099 = vmatpush1.msra.mxu0 %v1041
    %1100 = vmatprep.subr.mxu0 %v1046
    %1101 = vmatpush1.msra.mxu0 %v1045
    %1102 = vmatprep.subr.mxu0 %v1050
    %1103 = vmatpush1.msra.mxu0 %v1049
    %1104 = vmatprep.subr.mxu0 %v1054
    %1105 = vmatpush1.msra.mxu0 %v1053
    %1106 = vmatprep.subr.mxu0 %v1058
    %1107 = vmatpush1.msra.mxu0 %v1057
    %1108 = vmatprep.subr.mxu0 %v1062
    %1109 = vmatpush1.msra.mxu0 %v1061
    %1110 = vmatprep.subr.mxu0 %v1066
    %1111 = vmatpush1.msra.mxu0 %v1065
    %1112 = vmatprep.subr.mxu0 0.0
    %1113 = vmatpush1.msra.mxu0 0.0
    %1114 = vmatprep.subr.mxu0 0.0
    %1115 = vmatpush1.msra.mxu0 0.0
    %1116 = vmatprep.subr.mxu0 0.0
    %1117 = vmatpush1.msra.mxu0 0.0
    %1118 = vmatprep.subr.mxu0 0.0
    %1119 = vmatpush1.msra.mxu0 0.0
    %1120 = vmatprep.subr.mxu0 0.0
    %1121 = vmatpush1.msra.mxu0 0.0
    %1122 = vmatprep.subr.mxu0 0.0
    %1123 = vmatpush1.msra.mxu0 0.0
    %1124 = vmatprep.subr.mxu0 0.0
    %1125 = vmatpush1.msra.mxu0 0.0
    %1126 = vmatprep.subr.mxu0 0.0
    %1127 = vmatpush1.msra.mxu0 0.0
    %1128 = vmatprep.subr.mxu0 0.0
    %1129 = vmatpush1.msra.mxu0 0.0
    %1130 = vmatprep.subr.mxu0 0.0
    %1131 = vmatpush1.msra.mxu0 0.0
    %1132 = vmatprep.subr.mxu0 0.0
    %1133 = vmatpush1.msra.mxu0 0.0
    %1134 = vmatprep.subr.mxu0 0.0
    %1135 = vmatpush1.msra.mxu0 0.0
    %1136 = vmatprep.subr.mxu0 0.0
    %1137 = vmatpush1.msra.mxu0 0.0
    %1138 = vmatprep.mubr.f32.mxu0 %v1072
    %1139 = vmatmul.mubr.f32.gmra.mrb[0].mxu0 %v992
    %v1140 = vpop.f32.mrb[0].mxu0
    %v1141 = vadd.f32 %v55, %v1140
    %v1142 = vpop.f32.mrb[0].mxu0
    %v1143 = vadd.f32 %v61, %v1142
    %1144 = vdwg.mxu0
    %1145 = vmatprep.subr.mxu0 %v996
    %1146 = vmatpush1.msra.mxu0 %v995
    %1147 = vmatprep.subr.mxu0 %v1000
    %1148 = vmatpush1.msra.mxu0 %v999
    %1149 = vmatprep.subr.mxu0 %v1004
    %1150 = vmatpush1.msra.mxu0 %v1003
    %1151 = vmatprep.subr.mxu0 %v1008
    %1152 = vmatpush1.msra.mxu0 %v1007
    %1153 = vmatprep.subr.mxu0 %v1012
    %1154 = vmatpush1.msra.mxu0 %v1011
    %1155 = vmatprep.subr.mxu0 %v1016
    %1156 = vmatpush1.msra.mxu0 %v1015
    %1157 = vmatprep.subr.mxu0 %v1020
    %1158 = vmatpush1.msra.mxu0 %v1019
    %1159 = vmatprep.subr.mxu0 %v1024
    %1160 = vmatpush1.msra.mxu0 %v1023
    %1161 = vmatprep.subr.mxu0 %v1028
    %1162 = vmatpush1.msra.mxu0 %v1027
    %1163 = vmatprep.subr.mxu0 %v1032
    %1164 = vmatpush1.msra.mxu0 %v1031
    %1165 = vmatprep.subr.mxu0 %v1036
    %1166 = vmatpush1.msra.mxu0 %v1035
    %1167 = vmatprep.subr.mxu0 %v1040
    %1168 = vmatpush1.msra.mxu0 %v1039
    %1169 = vmatprep.subr.mxu0 %v1044
    %1170 = vmatpush1.msra.mxu0 %v1043
    %1171 = vmatprep.subr.mxu0 %v1048
    %1172 = vmatpush1.msra.mxu0 %v1047
    %1173 = vmatprep.subr.mxu0 %v1052
    %1174 = vmatpush1.msra.mxu0 %v1051
    %1175 = vmatprep.subr.mxu0 %v1056
    %1176 = vmatpush1.msra.mxu0 %v1055
    %1177 = vmatprep.subr.mxu0 %v1060
    %1178 = vmatpush1.msra.mxu0 %v1059
    %1179 = vmatprep.subr.mxu0 %v1064
    %1180 = vmatpush1.msra.mxu0 %v1063
    %1181 = vmatprep.subr.mxu0 %v1068
    %1182 = vmatpush1.msra.mxu0 %v1067
    %1183 = vmatprep.subr.mxu0 0.0
    %1184 = vmatpush1.msra.mxu0 0.0
    %1185 = vmatprep.subr.mxu0 0.0
    %1186 = vmatpush1.msra.mxu0 0.0
    %1187 = vmatprep.subr.mxu0 0.0
    %1188 = vmatpush1.msra.mxu0 0.0
    %1189 = vmatprep.subr.mxu0 0.0
    %1190 = vmatpush1.msra.mxu0 0.0
    %1191 = vmatprep.subr.mxu0 0.0
    %1192 = vmatpush1.msra.mxu0 0.0
    %1193 = vmatprep.subr.mxu0 0.0
    %1194 = vmatpush1.msra.mxu0 0.0
    %1195 = vmatprep.subr.mxu0 0.0
    %1196 = vmatpush1.msra.mxu0 0.0
    %1197 = vmatprep.subr.mxu0 0.0
    %1198 = vmatpush1.msra.mxu0 0.0
    %1199 = vmatprep.subr.mxu0 0.0
    %1200 = vmatpush1.msra.mxu0 0.0
    %1201 = vmatprep.subr.mxu0 0.0
    %1202 = vmatpush1.msra.mxu0 0.0
    %1203 = vmatprep.subr.mxu0 0.0
    %1204 = vmatpush1.msra.mxu0 0.0
    %1205 = vmatprep.subr.mxu0 0.0
    %1206 = vmatpush1.msra.mxu0 0.0
    %1207 = vmatprep.subr.mxu0 0.0
    %1208 = vmatpush1.msra.mxu0 0.0
    %1209 = vmatprep.mubr.f32.mxu0 %v1072
    %1210 = vmatmul.mubr.f32.gmra.mrb[0].mxu0 %v992
    %v1211 = vpop.f32.mrb[0].mxu0
    %v1212 = vadd.f32 %v56, %v1211
    %v1213 = vpop.f32.mrb[0].mxu0
    %v1214 = vadd.f32 %v62, %v1213
    %1215 = vdwg.mxu0
    %v1220 = vcombine.low %v1141, %v1143
    %v1221 = vcombine.low %v1212, %v1214
    %1224 = vst [vmem:[#allocation10] sm:$0xff] %v1220
    %1225 = vst [vmem:[#allocation10 + $0x8] sm:$0xff] %v1221
    // Predicated region
    $region30: #{tpu_custom_call.1} parent=1 // pred_check
      _
    $region31: #{tpu_custom_call.1} parent=1 // pred_check_branch
      %1227 = sbr.rel (0) target = $region33
    $region32: #{tpu_custom_call.1} parent=1 // pred_region
      %s1229 = ssub.s32 256, 256
      %1230 = vsyncadd [#allocation6], %s1229
      %s1232 = sshll.u32 [#allocation10], 4
      %s1233 = int_to_ptr.vmem [resolvable:$true] %s1232
      %1235 = dma.vmem_to_hbm [thread:$0]  %s1233, 256, %s4, [#allocation6]
    $region33: #{tpu_custom_call.1} parent=1 // pred_fallthru
      _
    // Predicated region
    $region34: #{tpu_custom_call.1} parent=1 // pred_check
      _
    $region35: #{tpu_custom_call.1} parent=1 // pred_check_branch
      %1237 = sbr.rel (0) target = $region37
    $region36: #{tpu_custom_call.1} parent=1 // pred_region
      %1238 = dma.done [#allocation6], 256
    $region37: #{tpu_custom_call.1} parent=1 // pred_fallthru
      _
    %1239 = vsyncpa [#allocation5], 1
    %1240 = vsyncpa [#allocation8], 1
    %1241 = vsyncpa [#allocation6], 1

</llo_original>
